<compile_context>
chip_gen: v7x
topology: tpu7x:2x2x1
jax: 0.10.0
libtpu: 0.0.40
codegen_flags: <defaults>
</compile_context>

<pallas_src>
import functools

import jax
import jax.numpy as jnp
from jax import lax
from jax.experimental import pallas as pl
from jax.experimental.pallas import tpu as pltpu


# PyTorch nn.LSTM packs gate rows as [i, f, g, o]; kernels use [i, f, o, g] so
# the sigmoid gates are contiguous and the tanh gate is last.
_GATE_ORDER = (0, 1, 3, 2)


# --------------------------------------------------------------------------- #
# Fused single-core kernel (both directions in one recurrence) - v5e / v6e.   #
# --------------------------------------------------------------------------- #
def _bilstm_fused_kernel(x_ref, wx_ref, wh_ref, out_ref, *, T, Bp):
    """x_ref: (T*Bp, D) time-major input (row t*Bp+b = x[b, t]).
    wx_ref : (D, 16H) input->gates, cols [fwd 8H | bwd 8H], each 8H block in
             interleaved order [i_f,i_b,f_f,f_b,o_f,o_b,g_f,g_b] with the other
             direction's columns zeroed.
    wh_ref : (2H, 8H) hidden->gates, rows [h_fwd ; h_bwd], same column layout.
    out_ref: (T*Bp, 2H) row t*Bp+b = [h_fwd(b,t) | h_bwd(b,t)].
    """
    H2 = out_ref.shape[1]                       # 2H (fused fwd|bwd width)
    H = H2 // 2
    G = 4 * H2                                  # 8H (all gates, both dirs)

    # Preamble: input->gate projections for all timesteps and both directions
    # in ONE matmul - entirely off the sequential critical path.
    xg = jnp.dot(x_ref[...], wx_ref[...],
                 preferred_element_type=jnp.float32)          # (T*Bp, 16H)

    h = jnp.zeros((Bp, H2), jnp.float32)
    c = jnp.zeros((Bp, H2), jnp.float32)

    for t in range(T):                          # fully unrolled, static indices
        tb = T - 1 - t                          # backward consumes x in reverse
        gx = xg[t * Bp:(t + 1) * Bp, 0:G] + xg[tb * Bp:(tb + 1) * Bp, G:2 * G]
        # wh stays in VMEM; read it inside the dot each step (no vreg pinning).
        gates = gx + jnp.dot(h, wh_ref[...],
                             preferred_element_type=jnp.float32)   # (Bp, 8H)

        sig = jax.nn.sigmoid(gates[:, 0:3 * H2])   # i/f/o only - no wasted EUP
        i = sig[:, 0 * H2:1 * H2]
        f = sig[:, 1 * H2:2 * H2]
        o = sig[:, 2 * H2:3 * H2]
        g = jnp.tanh(gates[:, 3 * H2:4 * H2])

        c = f * c + i * g
        h = o * jnp.tanh(c)

        out_ref[t * Bp:(t + 1) * Bp, 0:H] = h[:, 0:H]         # forward @ t
        out_ref[tb * Bp:(tb + 1) * Bp, H:H2] = h[:, H:H2]     # backward @ tb


# --------------------------------------------------------------------------- #
# Direction-split kernel: grid=(2,), one direction per grid point - v7x.      #
# --------------------------------------------------------------------------- #
def _lstm_dir_kernel(x_ref, wx_ref, wh_ref, out_ref, *, T, Bp):
    """Grid point d in {0 (forward), 1 (backward)}.
    x_ref  : (T*Bp, D)  shared time-major input.
    wx_ref : (D, 4H)    this direction's input->gates, cols [i, f, o, g].
    wh_ref : (H, 4H)    this direction's hidden->gates, same column order.
    out_ref: (T*Bp, H)  this direction's hidden states by output time index.
    """
    H4 = wh_ref.shape[-1]
    H = H4 // 4

    # Preamble matmul: all timesteps for this direction, off the critical path.
    xg = jnp.dot(x_ref[...], wx_ref[...],
                 preferred_element_type=jnp.float32)          # (T*Bp, 4H)

    def run(reverse):
        h = jnp.zeros((Bp, H), jnp.float32)
        c = jnp.zeros((Bp, H), jnp.float32)
        for s in range(T):
            t = (T - 1 - s) if reverse else s
            gates = xg[t * Bp:(t + 1) * Bp, :] + jnp.dot(
                h, wh_ref[...], preferred_element_type=jnp.float32)   # (Bp,4H)
            sig = jax.nn.sigmoid(gates[:, 0:3 * H])
            i = sig[:, 0:H]
            f = sig[:, H:2 * H]
            o = sig[:, 2 * H:3 * H]
            g = jnp.tanh(gates[:, 3 * H:4 * H])
            c = f * c + i * g
            h = o * jnp.tanh(c)
            out_ref[t * Bp:(t + 1) * Bp, :] = h

    @pl.when(pl.program_id(0) == 0)
    def _():
        run(False)

    @pl.when(pl.program_id(0) == 1)
    def _():
        run(True)


# --------------------------------------------------------------------------- #
# Weight packing (hoisted out of the forward pass; called once at init).      #
# --------------------------------------------------------------------------- #
def _reorder_gates(w):
    """(4H, K) PyTorch gate-row order [i,f,g,o] -> [i,f,o,g]."""
    H = w.shape[0] // 4
    return jnp.concatenate([w[g * H:(g + 1) * H] for g in _GATE_ORDER], axis=0)


def prepare_weights_fused(w_ih_f, w_hh_f, w_ih_b, w_hh_b):
    """Pack for the fused kernel: wx (D,16H), wh (2H,8H)."""
    H = w_hh_f.shape[1]

    def interleave(w, direction):
        # w: (4H, K) PyTorch layout; place gate blocks of `direction` at the
        # interleaved [i_f,i_b,f_f,f_b,o_f,o_b,g_f,g_b] columns, zeros at the
        # other direction's columns.
        K = w.shape[1]
        zeros = jnp.zeros((K, H), w.dtype)
        cols = []
        for p in _GATE_ORDER:                       # slot order [i, f, o, g]
            blk = w[p * H:(p + 1) * H].T            # (K, H)
            cols.extend([blk, zeros] if direction == 0 else [zeros, blk])
        return jnp.concatenate(cols, axis=1)        # (K, 8H)

    wx = jnp.concatenate([interleave(w_ih_f, 0),
                          interleave(w_ih_b, 1)], axis=1)      # (D, 16H)
    wh = jnp.concatenate([interleave(w_hh_f, 0),
                          interleave(w_hh_b, 1)], axis=0)      # (2H, 8H)
    return wx, wh


def prepare_weights_split(w_ih_f, w_hh_f, w_ih_b, w_hh_b):
    """Pack for the direction-split kernel: wxs (2,D,4H), whs (2,H,4H)."""
    wxs = jnp.stack([_reorder_gates(w_ih_f).T, _reorder_gates(w_ih_b).T])
    whs = jnp.stack([_reorder_gates(w_hh_f).T, _reorder_gates(w_hh_b).T])
    return wxs, whs


# --------------------------------------------------------------------------- #
# Wrappers.                                                                    #
# --------------------------------------------------------------------------- #
def _pad_time_major(x, Bp):
    """(B, T, D) -> (T*Bp, D), batch zero-padded to the 8-row sublane tile."""
    B, T, D = x.shape
    x = jnp.pad(x, ((0, Bp - B), (0, 0), (0, 0)))
    return jnp.transpose(x, (1, 0, 2)).reshape(T * Bp, D)


def _padded_batch(B):
    return max(8, ((B + 7) // 8) * 8)


@jax.jit
def bi_rnn_fout_fused(x, wx, wh):
    """Fused single-core forward (preferred on v5e / v6e). x: (B,T,D) f32."""
    B, T, D = x.shape
    H2 = wh.shape[0]                                           # 2H
    Bp = _padded_batch(B)
    x_tm = _pad_time_major(x, Bp)

    vmem = pl.BlockSpec(memory_space=pltpu.MemorySpace.VMEM)
    out_flat = pl.pallas_call(
        functools.partial(_bilstm_fused_kernel, T=T, Bp=Bp),
        out_shape=jax.ShapeDtypeStruct((T * Bp, H2), jnp.float32),
        in_specs=[vmem, vmem, vmem],
        out_specs=vmem,
    )(x_tm, wx, wh)

    out = out_flat.reshape(T, Bp, H2)[:, :B]                   # drop batch pad
    return jnp.transpose(out, (1, 0, 2))                       # (B, T, 2H)


@jax.jit
def bi_rnn_fout_split(x, wxs, whs):
    """Direction-split forward (one direction per grid point / TensorCore)."""
    B, T, D = x.shape
    H = whs.shape[-1] // 4
    Bp = _padded_batch(B)
    x_tm = _pad_time_major(x, Bp)

    out = pl.pallas_call(
        functools.partial(_lstm_dir_kernel, T=T, Bp=Bp),
        out_shape=jax.ShapeDtypeStruct((2, T * Bp, H), jnp.float32),
        grid=(2,),
        in_specs=[
            pl.BlockSpec((T * Bp, D), lambda d: (0, 0)),          # shared x
            pl.BlockSpec((None, D, 4 * H), lambda d: (d, 0, 0)),  # per-dir wx
            pl.BlockSpec((None, H, 4 * H), lambda d: (d, 0, 0)),  # per-dir wh
        ],
        out_specs=pl.BlockSpec((None, T * Bp, H), lambda d: (d, 0, 0)),
        compiler_params=pltpu.CompilerParams(
            dimension_semantics=("parallel",)),      # shards across TCs on v7x
    )(x_tm, wxs, whs)

    out = jnp.concatenate([out[0], out[1]], axis=-1)            # (T*Bp, 2H)
    out = out.reshape(T, Bp, 2 * H)[:, :B]
    return jnp.transpose(out, (1, 0, 2))                        # (B, T, 2H)


def _use_split_kernel():
    """Heuristic: split directions across cores only on 2-TC chips (v7x)."""
    try:
        return "v7" in jax.devices()[0].device_kind.lower()
    except Exception:
        return False


# --------------------------------------------------------------------------- #
# Pure-JAX reference (for checking).                                          #
# --------------------------------------------------------------------------- #
def _ref_bilstm(x, w_ih_f, w_hh_f, w_ih_b, w_hh_b):
    B, T, D = x.shape
    H = w_hh_f.shape[1]

    def run(xs, w_ih, w_hh):
        def cell(carry, x_t):
            h, c = carry
            gates = x_t @ w_ih.T + h @ w_hh.T
            i = jax.nn.sigmoid(gates[:, 0 * H:1 * H])
            f = jax.nn.sigmoid(gates[:, 1 * H:2 * H])
            g = jnp.tanh(gates[:, 2 * H:3 * H])
            o = jax.nn.sigmoid(gates[:, 3 * H:4 * H])
            c = f * c + i * g
            h = o * jnp.tanh(c)
            return (h, c), h
        h0 = jnp.zeros((B, H), jnp.float32)
        _, hs = lax.scan(cell, (h0, h0), xs)
        return hs                                               # (T, B, H)

    xs = jnp.transpose(x, (1, 0, 2))
    hs_f = run(xs, w_ih_f, w_hh_f)
    hs_b = run(xs[::-1], w_ih_b, w_hh_b)[::-1]
    out = jnp.concatenate([hs_f, hs_b], axis=-1)
    return jnp.transpose(out, (1, 0, 2))


if __name__ == "__main__":
    # Bi_RNN_FOUT(size=16, hidden_size=32) on input (B=2, T=8, D=16)
    B, T, D, H = 2, 8, 16, 32

    key = jax.random.PRNGKey(0)
    kx, k1, k2, k3, k4 = jax.random.split(key, 5)
    bound = 1.0 / jnp.sqrt(H)   # PyTorch LSTM default init U(-1/sqrt(H), 1/sqrt(H))

    x = jax.random.normal(kx, (B, T, D), jnp.float32)
    w_ih_f = jax.random.uniform(k1, (4 * H, D), jnp.float32, -bound, bound)
    w_hh_f = jax.random.uniform(k2, (4 * H, H), jnp.float32, -bound, bound)
    w_ih_b = jax.random.uniform(k3, (4 * H, D), jnp.float32, -bound, bound)
    w_hh_b = jax.random.uniform(k4, (4 * H, H), jnp.float32, -bound, bound)

    # weight packing happens once, at "module init" time
    wx, wh = prepare_weights_fused(w_ih_f, w_hh_f, w_ih_b, w_hh_b)
    wxs, whs = prepare_weights_split(w_ih_f, w_hh_f, w_ih_b, w_hh_b)

    ref = _ref_bilstm(x, w_ih_f, w_hh_f, w_ih_b, w_hh_b)

    # check both variants (the dispatcher picks split only on v7x-class chips)
    out_fused = jax.block_until_ready(bi_rnn_fout_fused(x, wx, wh))
    assert out_fused.shape == (B, T, 2 * H), out_fused.shape
    assert jnp.allclose(out_fused, ref, atol=1e-4, rtol=1e-4), float(
        jnp.max(jnp.abs(out_fused - ref)))

    out_split = jax.block_until_ready(bi_rnn_fout_split(x, wxs, whs))
    assert out_split.shape == (B, T, 2 * H), out_split.shape
    assert jnp.allclose(out_split, ref, atol=1e-4, rtol=1e-4), float(
        jnp.max(jnp.abs(out_split - ref)))

    # default path for this chip generation
    out = (bi_rnn_fout_split(x, wxs, whs) if _use_split_kernel()
           else bi_rnn_fout_fused(x, wx, wh))
    jax.block_until_ready(out)

    print("KERNEL_OK")
</pallas_src>

<mosaic_0001>
module attributes {stable_mosaic.version = 11 : i64} {
  func.func @_bilstm_fused_kernel(%arg0: memref<64x16xf32, #tpu.memory_space<vmem>>, %arg1: memref<16x512xf32, #tpu.memory_space<vmem>>, %arg2: memref<64x256xf32, #tpu.memory_space<vmem>>, %arg3: memref<64x64xf32, #tpu.memory_space<vmem>>) attributes {dimension_semantics = [], scalar_prefetch = 0 : i64, scratch_operands = 0 : i64, tpu.core_type = #tpu.core_type<tc>} {
    %c0 = arith.constant 0 : index
    %c0_0 = arith.constant 0 : index
    %0 = vector.load %arg0[%c0, %c0_0] : memref<64x16xf32, #tpu.memory_space<vmem>>, vector<64x16xf32>
    %c0_1 = arith.constant 0 : index
    %c0_2 = arith.constant 0 : index
    %1 = vector.load %arg1[%c0_1, %c0_2] : memref<16x512xf32, #tpu.memory_space<vmem>>, vector<16x512xf32>
    %cst = arith.constant dense<0.000000e+00> : vector<64x512xf32>
    %2 = tpu.matmul %0, %1, %cst {dimension_numbers = #tpu.dot_dimension_numbers<[1], [0], [0], [1], [0, 0, 1, 1], [], []>} : vector<64x16xf32>, vector<16x512xf32>, vector<64x512xf32> -> vector<64x512xf32>
    %cst_3 = arith.constant 0.000000e+00 : f32
    %3 = vector.broadcast %cst_3 : f32 to vector<8x64xf32>
    %cst_4 = arith.constant 0.000000e+00 : f32
    %4 = vector.broadcast %cst_4 : f32 to vector<8x64xf32>
    %5 = vector.extract_strided_slice %2 {offsets = [0, 0], sizes = [8, 256], strides = [1, 1]} : vector<64x512xf32> to vector<8x256xf32>
    %6 = vector.extract_strided_slice %2 {offsets = [56, 256], sizes = [8, 256], strides = [1, 1]} : vector<64x512xf32> to vector<8x256xf32>
    %7 = arith.addf %5, %6 : vector<8x256xf32>
    %c0_5 = arith.constant 0 : index
    %c0_6 = arith.constant 0 : index
    %8 = vector.load %arg2[%c0_5, %c0_6] : memref<64x256xf32, #tpu.memory_space<vmem>>, vector<64x256xf32>
    %cst_7 = arith.constant dense<0.000000e+00> : vector<8x256xf32>
    %9 = tpu.matmul %3, %8, %cst_7 {dimension_numbers = #tpu.dot_dimension_numbers<[1], [0], [0], [1], [0, 0, 1, 1], [], []>} : vector<8x64xf32>, vector<64x256xf32>, vector<8x256xf32> -> vector<8x256xf32>
    %10 = arith.addf %7, %9 : vector<8x256xf32>
    %11 = vector.extract_strided_slice %10 {offsets = [0, 0], sizes = [8, 192], strides = [1, 1]} : vector<8x256xf32> to vector<8x192xf32>
    %12 = arith.negf %11 : vector<8x192xf32>
    %13 = math.exp %12 : vector<8x192xf32>
    %cst_8 = arith.constant 1.000000e+00 : f32
    %14 = vector.broadcast %cst_8 : f32 to vector<8x192xf32>
    %15 = arith.addf %14, %13 : vector<8x192xf32>
    %16 = arith.divf %14, %15 : vector<8x192xf32>
    %17 = vector.extract_strided_slice %16 {offsets = [0, 0], sizes = [8, 64], strides = [1, 1]} : vector<8x192xf32> to vector<8x64xf32>
    %18 = vector.extract_strided_slice %16 {offsets = [0, 64], sizes = [8, 64], strides = [1, 1]} : vector<8x192xf32> to vector<8x64xf32>
    %19 = vector.extract_strided_slice %16 {offsets = [0, 128], sizes = [8, 64], strides = [1, 1]} : vector<8x192xf32> to vector<8x64xf32>
    %20 = vector.extract_strided_slice %10 {offsets = [0, 192], sizes = [8, 64], strides = [1, 1]} : vector<8x256xf32> to vector<8x64xf32>
    %21 = math.tanh %20 : vector<8x64xf32>
    %22 = arith.mulf %18, %4 : vector<8x64xf32>
    %23 = arith.mulf %17, %21 : vector<8x64xf32>
    %24 = arith.addf %22, %23 : vector<8x64xf32>
    %25 = math.tanh %24 : vector<8x64xf32>
    %26 = arith.mulf %19, %25 : vector<8x64xf32>
    %27 = vector.extract_strided_slice %26 {offsets = [0, 0], sizes = [8, 32], strides = [1, 1]} : vector<8x64xf32> to vector<8x32xf32>
    %c0_9 = arith.constant 0 : index
    %c0_10 = arith.constant 0 : index
    %28 = vector.load %arg3[%c0_9, %c0_10] : memref<64x64xf32, #tpu.memory_space<vmem>>, vector<8x32xf32>
    tpu.vector_store %arg3[%c0_9, %c0_10], %27 {strides = array<i32>} : memref<64x64xf32, #tpu.memory_space<vmem>>, vector<8x32xf32>,
    %29 = vector.extract_strided_slice %26 {offsets = [0, 32], sizes = [8, 32], strides = [1, 1]} : vector<8x64xf32> to vector<8x32xf32>
    %c56 = arith.constant 56 : index
    %c32 = arith.constant 32 : index
    %30 = vector.load %arg3[%c56, %c32] : memref<64x64xf32, #tpu.memory_space<vmem>>, vector<8x32xf32>
    tpu.vector_store %arg3[%c56, %c32], %29 {strides = array<i32>} : memref<64x64xf32, #tpu.memory_space<vmem>>, vector<8x32xf32>,
    %31 = vector.extract_strided_slice %2 {offsets = [8, 0], sizes = [8, 256], strides = [1, 1]} : vector<64x512xf32> to vector<8x256xf32>
    %32 = vector.extract_strided_slice %2 {offsets = [48, 256], sizes = [8, 256], strides = [1, 1]} : vector<64x512xf32> to vector<8x256xf32>
    %33 = arith.addf %31, %32 : vector<8x256xf32>
    %c0_11 = arith.constant 0 : index
    %c0_12 = arith.constant 0 : index
    %34 = vector.load %arg2[%c0_11, %c0_12] : memref<64x256xf32, #tpu.memory_space<vmem>>, vector<64x256xf32>
    %cst_13 = arith.constant dense<0.000000e+00> : vector<8x256xf32>
    %35 = tpu.matmul %26, %34, %cst_13 {dimension_numbers = #tpu.dot_dimension_numbers<[1], [0], [0], [1], [0, 0, 1, 1], [], []>} : vector<8x64xf32>, vector<64x256xf32>, vector<8x256xf32> -> vector<8x256xf32>
    %36 = arith.addf %33, %35 : vector<8x256xf32>
    %37 = vector.extract_strided_slice %36 {offsets = [0, 0], sizes = [8, 192], strides = [1, 1]} : vector<8x256xf32> to vector<8x192xf32>
    %38 = arith.negf %37 : vector<8x192xf32>
    %39 = math.exp %38 : vector<8x192xf32>
    %cst_14 = arith.constant 1.000000e+00 : f32
    %40 = vector.broadcast %cst_14 : f32 to vector<8x192xf32>
    %41 = arith.addf %40, %39 : vector<8x192xf32>
    %42 = arith.divf %40, %41 : vector<8x192xf32>
    %43 = vector.extract_strided_slice %42 {offsets = [0, 0], sizes = [8, 64], strides = [1, 1]} : vector<8x192xf32> to vector<8x64xf32>
    %44 = vector.extract_strided_slice %42 {offsets = [0, 64], sizes = [8, 64], strides = [1, 1]} : vector<8x192xf32> to vector<8x64xf32>
    %45 = vector.extract_strided_slice %42 {offsets = [0, 128], sizes = [8, 64], strides = [1, 1]} : vector<8x192xf32> to vector<8x64xf32>
    %46 = vector.extract_strided_slice %36 {offsets = [0, 192], sizes = [8, 64], strides = [1, 1]} : vector<8x256xf32> to vector<8x64xf32>
    %47 = math.tanh %46 : vector<8x64xf32>
    %48 = arith.mulf %44, %24 : vector<8x64xf32>
    %49 = arith.mulf %43, %47 : vector<8x64xf32>
    %50 = arith.addf %48, %49 : vector<8x64xf32>
    %51 = math.tanh %50 : vector<8x64xf32>
    %52 = arith.mulf %45, %51 : vector<8x64xf32>
    %53 = vector.extract_strided_slice %52 {offsets = [0, 0], sizes = [8, 32], strides = [1, 1]} : vector<8x64xf32> to vector<8x32xf32>
    %c8 = arith.constant 8 : index
    %c0_15 = arith.constant 0 : index
    %54 = vector.load %arg3[%c8, %c0_15] : memref<64x64xf32, #tpu.memory_space<vmem>>, vector<8x32xf32>
    tpu.vector_store %arg3[%c8, %c0_15], %53 {strides = array<i32>} : memref<64x64xf32, #tpu.memory_space<vmem>>, vector<8x32xf32>,
    %55 = vector.extract_strided_slice %52 {offsets = [0, 32], sizes = [8, 32], strides = [1, 1]} : vector<8x64xf32> to vector<8x32xf32>
    %c48 = arith.constant 48 : index
    %c32_16 = arith.constant 32 : index
    %56 = vector.load %arg3[%c48, %c32_16] : memref<64x64xf32, #tpu.memory_space<vmem>>, vector<8x32xf32>
    tpu.vector_store %arg3[%c48, %c32_16], %55 {strides = array<i32>} : memref<64x64xf32, #tpu.memory_space<vmem>>, vector<8x32xf32>,
    %57 = vector.extract_strided_slice %2 {offsets = [16, 0], sizes = [8, 256], strides = [1, 1]} : vector<64x512xf32> to vector<8x256xf32>
    %58 = vector.extract_strided_slice %2 {offsets = [40, 256], sizes = [8, 256], strides = [1, 1]} : vector<64x512xf32> to vector<8x256xf32>
    %59 = arith.addf %57, %58 : vector<8x256xf32>
    %c0_17 = arith.constant 0 : index
    %c0_18 = arith.constant 0 : index
    %60 = vector.load %arg2[%c0_17, %c0_18] : memref<64x256xf32, #tpu.memory_space<vmem>>, vector<64x256xf32>
    %cst_19 = arith.constant dense<0.000000e+00> : vector<8x256xf32>
    %61 = tpu.matmul %52, %60, %cst_19 {dimension_numbers = #tpu.dot_dimension_numbers<[1], [0], [0], [1], [0, 0, 1, 1], [], []>} : vector<8x64xf32>, vector<64x256xf32>, vector<8x256xf32> -> vector<8x256xf32>
    %62 = arith.addf %59, %61 : vector<8x256xf32>
    %63 = vector.extract_strided_slice %62 {offsets = [0, 0], sizes = [8, 192], strides = [1, 1]} : vector<8x256xf32> to vector<8x192xf32>
    %64 = arith.negf %63 : vector<8x192xf32>
    %65 = math.exp %64 : vector<8x192xf32>
    %cst_20 = arith.constant 1.000000e+00 : f32
    %66 = vector.broadcast %cst_20 : f32 to vector<8x192xf32>
    %67 = arith.addf %66, %65 : vector<8x192xf32>
    %68 = arith.divf %66, %67 : vector<8x192xf32>
    %69 = vector.extract_strided_slice %68 {offsets = [0, 0], sizes = [8, 64], strides = [1, 1]} : vector<8x192xf32> to vector<8x64xf32>
    %70 = vector.extract_strided_slice %68 {offsets = [0, 64], sizes = [8, 64], strides = [1, 1]} : vector<8x192xf32> to vector<8x64xf32>
    %71 = vector.extract_strided_slice %68 {offsets = [0, 128], sizes = [8, 64], strides = [1, 1]} : vector<8x192xf32> to vector<8x64xf32>
    %72 = vector.extract_strided_slice %62 {offsets = [0, 192], sizes = [8, 64], strides = [1, 1]} : vector<8x256xf32> to vector<8x64xf32>
    %73 = math.tanh %72 : vector<8x64xf32>
    %74 = arith.mulf %70, %50 : vector<8x64xf32>
    %75 = arith.mulf %69, %73 : vector<8x64xf32>
    %76 = arith.addf %74, %75 : vector<8x64xf32>
    %77 = math.tanh %76 : vector<8x64xf32>
    %78 = arith.mulf %71, %77 : vector<8x64xf32>
    %79 = vector.extract_strided_slice %78 {offsets = [0, 0], sizes = [8, 32], strides = [1, 1]} : vector<8x64xf32> to vector<8x32xf32>
    %c16 = arith.constant 16 : index
    %c0_21 = arith.constant 0 : index
    %80 = vector.load %arg3[%c16, %c0_21] : memref<64x64xf32, #tpu.memory_space<vmem>>, vector<8x32xf32>
    tpu.vector_store %arg3[%c16, %c0_21], %79 {strides = array<i32>} : memref<64x64xf32, #tpu.memory_space<vmem>>, vector<8x32xf32>,
    %81 = vector.extract_strided_slice %78 {offsets = [0, 32], sizes = [8, 32], strides = [1, 1]} : vector<8x64xf32> to vector<8x32xf32>
    %c40 = arith.constant 40 : index
    %c32_22 = arith.constant 32 : index
    %82 = vector.load %arg3[%c40, %c32_22] : memref<64x64xf32, #tpu.memory_space<vmem>>, vector<8x32xf32>
    tpu.vector_store %arg3[%c40, %c32_22], %81 {strides = array<i32>} : memref<64x64xf32, #tpu.memory_space<vmem>>, vector<8x32xf32>,
    %83 = vector.extract_strided_slice %2 {offsets = [24, 0], sizes = [8, 256], strides = [1, 1]} : vector<64x512xf32> to vector<8x256xf32>
    %84 = vector.extract_strided_slice %2 {offsets = [32, 256], sizes = [8, 256], strides = [1, 1]} : vector<64x512xf32> to vector<8x256xf32>
    %85 = arith.addf %83, %84 : vector<8x256xf32>
    %c0_23 = arith.constant 0 : index
    %c0_24 = arith.constant 0 : index
    %86 = vector.load %arg2[%c0_23, %c0_24] : memref<64x256xf32, #tpu.memory_space<vmem>>, vector<64x256xf32>
    %cst_25 = arith.constant dense<0.000000e+00> : vector<8x256xf32>
    %87 = tpu.matmul %78, %86, %cst_25 {dimension_numbers = #tpu.dot_dimension_numbers<[1], [0], [0], [1], [0, 0, 1, 1], [], []>} : vector<8x64xf32>, vector<64x256xf32>, vector<8x256xf32> -> vector<8x256xf32>
    %88 = arith.addf %85, %87 : vector<8x256xf32>
    %89 = vector.extract_strided_slice %88 {offsets = [0, 0], sizes = [8, 192], strides = [1, 1]} : vector<8x256xf32> to vector<8x192xf32>
    %90 = arith.negf %89 : vector<8x192xf32>
    %91 = math.exp %90 : vector<8x192xf32>
    %cst_26 = arith.constant 1.000000e+00 : f32
    %92 = vector.broadcast %cst_26 : f32 to vector<8x192xf32>
    %93 = arith.addf %92, %91 : vector<8x192xf32>
    %94 = arith.divf %92, %93 : vector<8x192xf32>
    %95 = vector.extract_strided_slice %94 {offsets = [0, 0], sizes = [8, 64], strides = [1, 1]} : vector<8x192xf32> to vector<8x64xf32>
    %96 = vector.extract_strided_slice %94 {offsets = [0, 64], sizes = [8, 64], strides = [1, 1]} : vector<8x192xf32> to vector<8x64xf32>
    %97 = vector.extract_strided_slice %94 {offsets = [0, 128], sizes = [8, 64], strides = [1, 1]} : vector<8x192xf32> to vector<8x64xf32>
    %98 = vector.extract_strided_slice %88 {offsets = [0, 192], sizes = [8, 64], strides = [1, 1]} : vector<8x256xf32> to vector<8x64xf32>
    %99 = math.tanh %98 : vector<8x64xf32>
    %100 = arith.mulf %96, %76 : vector<8x64xf32>
    %101 = arith.mulf %95, %99 : vector<8x64xf32>
    %102 = arith.addf %100, %101 : vector<8x64xf32>
    %103 = math.tanh %102 : vector<8x64xf32>
    %104 = arith.mulf %97, %103 : vector<8x64xf32>
    %105 = vector.extract_strided_slice %104 {offsets = [0, 0], sizes = [8, 32], strides = [1, 1]} : vector<8x64xf32> to vector<8x32xf32>
    %c24 = arith.constant 24 : index
    %c0_27 = arith.constant 0 : index
    %106 = vector.load %arg3[%c24, %c0_27] : memref<64x64xf32, #tpu.memory_space<vmem>>, vector<8x32xf32>
    tpu.vector_store %arg3[%c24, %c0_27], %105 {strides = array<i32>} : memref<64x64xf32, #tpu.memory_space<vmem>>, vector<8x32xf32>,
    %107 = vector.extract_strided_slice %104 {offsets = [0, 32], sizes = [8, 32], strides = [1, 1]} : vector<8x64xf32> to vector<8x32xf32>
    %c32_28 = arith.constant 32 : index
    %c32_29 = arith.constant 32 : index
    %108 = vector.load %arg3[%c32_28, %c32_29] : memref<64x64xf32, #tpu.memory_space<vmem>>, vector<8x32xf32>
    tpu.vector_store %arg3[%c32_28, %c32_29], %107 {strides = array<i32>} : memref<64x64xf32, #tpu.memory_space<vmem>>, vector<8x32xf32>,
    %109 = vector.extract_strided_slice %2 {offsets = [32, 0], sizes = [8, 256], strides = [1, 1]} : vector<64x512xf32> to vector<8x256xf32>
    %110 = vector.extract_strided_slice %2 {offsets = [24, 256], sizes = [8, 256], strides = [1, 1]} : vector<64x512xf32> to vector<8x256xf32>
    %111 = arith.addf %109, %110 : vector<8x256xf32>
    %c0_30 = arith.constant 0 : index
    %c0_31 = arith.constant 0 : index
    %112 = vector.load %arg2[%c0_30, %c0_31] : memref<64x256xf32, #tpu.memory_space<vmem>>, vector<64x256xf32>
    %cst_32 = arith.constant dense<0.000000e+00> : vector<8x256xf32>
    %113 = tpu.matmul %104, %112, %cst_32 {dimension_numbers = #tpu.dot_dimension_numbers<[1], [0], [0], [1], [0, 0, 1, 1], [], []>} : vector<8x64xf32>, vector<64x256xf32>, vector<8x256xf32> -> vector<8x256xf32>
    %114 = arith.addf %111, %113 : vector<8x256xf32>
    %115 = vector.extract_strided_slice %114 {offsets = [0, 0], sizes = [8, 192], strides = [1, 1]} : vector<8x256xf32> to vector<8x192xf32>
    %116 = arith.negf %115 : vector<8x192xf32>
    %117 = math.exp %116 : vector<8x192xf32>
    %cst_33 = arith.constant 1.000000e+00 : f32
    %118 = vector.broadcast %cst_33 : f32 to vector<8x192xf32>
    %119 = arith.addf %118, %117 : vector<8x192xf32>
    %120 = arith.divf %118, %119 : vector<8x192xf32>
    %121 = vector.extract_strided_slice %120 {offsets = [0, 0], sizes = [8, 64], strides = [1, 1]} : vector<8x192xf32> to vector<8x64xf32>
    %122 = vector.extract_strided_slice %120 {offsets = [0, 64], sizes = [8, 64], strides = [1, 1]} : vector<8x192xf32> to vector<8x64xf32>
    %123 = vector.extract_strided_slice %120 {offsets = [0, 128], sizes = [8, 64], strides = [1, 1]} : vector<8x192xf32> to vector<8x64xf32>
    %124 = vector.extract_strided_slice %114 {offsets = [0, 192], sizes = [8, 64], strides = [1, 1]} : vector<8x256xf32> to vector<8x64xf32>
    %125 = math.tanh %124 : vector<8x64xf32>
    %126 = arith.mulf %122, %102 : vector<8x64xf32>
    %127 = arith.mulf %121, %125 : vector<8x64xf32>
    %128 = arith.addf %126, %127 : vector<8x64xf32>
    %129 = math.tanh %128 : vector<8x64xf32>
    %130 = arith.mulf %123, %129 : vector<8x64xf32>
    %131 = vector.extract_strided_slice %130 {offsets = [0, 0], sizes = [8, 32], strides = [1, 1]} : vector<8x64xf32> to vector<8x32xf32>
    %c32_34 = arith.constant 32 : index
    %c0_35 = arith.constant 0 : index
    %132 = vector.load %arg3[%c32_34, %c0_35] : memref<64x64xf32, #tpu.memory_space<vmem>>, vector<8x32xf32>
    tpu.vector_store %arg3[%c32_34, %c0_35], %131 {strides = array<i32>} : memref<64x64xf32, #tpu.memory_space<vmem>>, vector<8x32xf32>,
    %133 = vector.extract_strided_slice %130 {offsets = [0, 32], sizes = [8, 32], strides = [1, 1]} : vector<8x64xf32> to vector<8x32xf32>
    %c24_36 = arith.constant 24 : index
    %c32_37 = arith.constant 32 : index
    %134 = vector.load %arg3[%c24_36, %c32_37] : memref<64x64xf32, #tpu.memory_space<vmem>>, vector<8x32xf32>
    tpu.vector_store %arg3[%c24_36, %c32_37], %133 {strides = array<i32>} : memref<64x64xf32, #tpu.memory_space<vmem>>, vector<8x32xf32>,
    %135 = vector.extract_strided_slice %2 {offsets = [40, 0], sizes = [8, 256], strides = [1, 1]} : vector<64x512xf32> to vector<8x256xf32>
    %136 = vector.extract_strided_slice %2 {offsets = [16, 256], sizes = [8, 256], strides = [1, 1]} : vector<64x512xf32> to vector<8x256xf32>
    %137 = arith.addf %135, %136 : vector<8x256xf32>
    %c0_38 = arith.constant 0 : index
    %c0_39 = arith.constant 0 : index
    %138 = vector.load %arg2[%c0_38, %c0_39] : memref<64x256xf32, #tpu.memory_space<vmem>>, vector<64x256xf32>
    %cst_40 = arith.constant dense<0.000000e+00> : vector<8x256xf32>
    %139 = tpu.matmul %130, %138, %cst_40 {dimension_numbers = #tpu.dot_dimension_numbers<[1], [0], [0], [1], [0, 0, 1, 1], [], []>} : vector<8x64xf32>, vector<64x256xf32>, vector<8x256xf32> -> vector<8x256xf32>
    %140 = arith.addf %137, %139 : vector<8x256xf32>
    %141 = vector.extract_strided_slice %140 {offsets = [0, 0], sizes = [8, 192], strides = [1, 1]} : vector<8x256xf32> to vector<8x192xf32>
    %142 = arith.negf %141 : vector<8x192xf32>
    %143 = math.exp %142 : vector<8x192xf32>
    %cst_41 = arith.constant 1.000000e+00 : f32
    %144 = vector.broadcast %cst_41 : f32 to vector<8x192xf32>
    %145 = arith.addf %144, %143 : vector<8x192xf32>
    %146 = arith.divf %144, %145 : vector<8x192xf32>
    %147 = vector.extract_strided_slice %146 {offsets = [0, 0], sizes = [8, 64], strides = [1, 1]} : vector<8x192xf32> to vector<8x64xf32>
    %148 = vector.extract_strided_slice %146 {offsets = [0, 64], sizes = [8, 64], strides = [1, 1]} : vector<8x192xf32> to vector<8x64xf32>
    %149 = vector.extract_strided_slice %146 {offsets = [0, 128], sizes = [8, 64], strides = [1, 1]} : vector<8x192xf32> to vector<8x64xf32>
    %150 = vector.extract_strided_slice %140 {offsets = [0, 192], sizes = [8, 64], strides = [1, 1]} : vector<8x256xf32> to vector<8x64xf32>
    %151 = math.tanh %150 : vector<8x64xf32>
    %152 = arith.mulf %148, %128 : vector<8x64xf32>
    %153 = arith.mulf %147, %151 : vector<8x64xf32>
    %154 = arith.addf %152, %153 : vector<8x64xf32>
    %155 = math.tanh %154 : vector<8x64xf32>
    %156 = arith.mulf %149, %155 : vector<8x64xf32>
    %157 = vector.extract_strided_slice %156 {offsets = [0, 0], sizes = [8, 32], strides = [1, 1]} : vector<8x64xf32> to vector<8x32xf32>
    %c40_42 = arith.constant 40 : index
    %c0_43 = arith.constant 0 : index
    %158 = vector.load %arg3[%c40_42, %c0_43] : memref<64x64xf32, #tpu.memory_space<vmem>>, vector<8x32xf32>
    tpu.vector_store %arg3[%c40_42, %c0_43], %157 {strides = array<i32>} : memref<64x64xf32, #tpu.memory_space<vmem>>, vector<8x32xf32>,
    %159 = vector.extract_strided_slice %156 {offsets = [0, 32], sizes = [8, 32], strides = [1, 1]} : vector<8x64xf32> to vector<8x32xf32>
    %c16_44 = arith.constant 16 : index
    %c32_45 = arith.constant 32 : index
    %160 = vector.load %arg3[%c16_44, %c32_45] : memref<64x64xf32, #tpu.memory_space<vmem>>, vector<8x32xf32>
    tpu.vector_store %arg3[%c16_44, %c32_45], %159 {strides = array<i32>} : memref<64x64xf32, #tpu.memory_space<vmem>>, vector<8x32xf32>,
    %161 = vector.extract_strided_slice %2 {offsets = [48, 0], sizes = [8, 256], strides = [1, 1]} : vector<64x512xf32> to vector<8x256xf32>
    %162 = vector.extract_strided_slice %2 {offsets = [8, 256], sizes = [8, 256], strides = [1, 1]} : vector<64x512xf32> to vector<8x256xf32>
    %163 = arith.addf %161, %162 : vector<8x256xf32>
    %c0_46 = arith.constant 0 : index
    %c0_47 = arith.constant 0 : index
    %164 = vector.load %arg2[%c0_46, %c0_47] : memref<64x256xf32, #tpu.memory_space<vmem>>, vector<64x256xf32>
    %cst_48 = arith.constant dense<0.000000e+00> : vector<8x256xf32>
    %165 = tpu.matmul %156, %164, %cst_48 {dimension_numbers = #tpu.dot_dimension_numbers<[1], [0], [0], [1], [0, 0, 1, 1], [], []>} : vector<8x64xf32>, vector<64x256xf32>, vector<8x256xf32> -> vector<8x256xf32>
    %166 = arith.addf %163, %165 : vector<8x256xf32>
    %167 = vector.extract_strided_slice %166 {offsets = [0, 0], sizes = [8, 192], strides = [1, 1]} : vector<8x256xf32> to vector<8x192xf32>
    %168 = arith.negf %167 : vector<8x192xf32>
    %169 = math.exp %168 : vector<8x192xf32>
    %cst_49 = arith.constant 1.000000e+00 : f32
    %170 = vector.broadcast %cst_49 : f32 to vector<8x192xf32>
    %171 = arith.addf %170, %169 : vector<8x192xf32>
    %172 = arith.divf %170, %171 : vector<8x192xf32>
    %173 = vector.extract_strided_slice %172 {offsets = [0, 0], sizes = [8, 64], strides = [1, 1]} : vector<8x192xf32> to vector<8x64xf32>
    %174 = vector.extract_strided_slice %172 {offsets = [0, 64], sizes = [8, 64], strides = [1, 1]} : vector<8x192xf32> to vector<8x64xf32>
    %175 = vector.extract_strided_slice %172 {offsets = [0, 128], sizes = [8, 64], strides = [1, 1]} : vector<8x192xf32> to vector<8x64xf32>
    %176 = vector.extract_strided_slice %166 {offsets = [0, 192], sizes = [8, 64], strides = [1, 1]} : vector<8x256xf32> to vector<8x64xf32>
    %177 = math.tanh %176 : vector<8x64xf32>
    %178 = arith.mulf %174, %154 : vector<8x64xf32>
    %179 = arith.mulf %173, %177 : vector<8x64xf32>
    %180 = arith.addf %178, %179 : vector<8x64xf32>
    %181 = math.tanh %180 : vector<8x64xf32>
    %182 = arith.mulf %175, %181 : vector<8x64xf32>
    %183 = vector.extract_strided_slice %182 {offsets = [0, 0], sizes = [8, 32], strides = [1, 1]} : vector<8x64xf32> to vector<8x32xf32>
    %c48_50 = arith.constant 48 : index
    %c0_51 = arith.constant 0 : index
    %184 = vector.load %arg3[%c48_50, %c0_51] : memref<64x64xf32, #tpu.memory_space<vmem>>, vector<8x32xf32>
    tpu.vector_store %arg3[%c48_50, %c0_51], %183 {strides = array<i32>} : memref<64x64xf32, #tpu.memory_space<vmem>>, vector<8x32xf32>,
    %185 = vector.extract_strided_slice %182 {offsets = [0, 32], sizes = [8, 32], strides = [1, 1]} : vector<8x64xf32> to vector<8x32xf32>
    %c8_52 = arith.constant 8 : index
    %c32_53 = arith.constant 32 : index
    %186 = vector.load %arg3[%c8_52, %c32_53] : memref<64x64xf32, #tpu.memory_space<vmem>>, vector<8x32xf32>
    tpu.vector_store %arg3[%c8_52, %c32_53], %185 {strides = array<i32>} : memref<64x64xf32, #tpu.memory_space<vmem>>, vector<8x32xf32>,
    %187 = vector.extract_strided_slice %2 {offsets = [56, 0], sizes = [8, 256], strides = [1, 1]} : vector<64x512xf32> to vector<8x256xf32>
    %188 = vector.extract_strided_slice %2 {offsets = [0, 256], sizes = [8, 256], strides = [1, 1]} : vector<64x512xf32> to vector<8x256xf32>
    %189 = arith.addf %187, %188 : vector<8x256xf32>
    %c0_54 = arith.constant 0 : index
    %c0_55 = arith.constant 0 : index
    %190 = vector.load %arg2[%c0_54, %c0_55] : memref<64x256xf32, #tpu.memory_space<vmem>>, vector<64x256xf32>
    %cst_56 = arith.constant dense<0.000000e+00> : vector<8x256xf32>
    %191 = tpu.matmul %182, %190, %cst_56 {dimension_numbers = #tpu.dot_dimension_numbers<[1], [0], [0], [1], [0, 0, 1, 1], [], []>} : vector<8x64xf32>, vector<64x256xf32>, vector<8x256xf32> -> vector<8x256xf32>
    %192 = arith.addf %189, %191 : vector<8x256xf32>
    %193 = vector.extract_strided_slice %192 {offsets = [0, 0], sizes = [8, 192], strides = [1, 1]} : vector<8x256xf32> to vector<8x192xf32>
    %194 = arith.negf %193 : vector<8x192xf32>
    %195 = math.exp %194 : vector<8x192xf32>
    %cst_57 = arith.constant 1.000000e+00 : f32
    %196 = vector.broadcast %cst_57 : f32 to vector<8x192xf32>
    %197 = arith.addf %196, %195 : vector<8x192xf32>
    %198 = arith.divf %196, %197 : vector<8x192xf32>
    %199 = vector.extract_strided_slice %198 {offsets = [0, 0], sizes = [8, 64], strides = [1, 1]} : vector<8x192xf32> to vector<8x64xf32>
    %200 = vector.extract_strided_slice %198 {offsets = [0, 64], sizes = [8, 64], strides = [1, 1]} : vector<8x192xf32> to vector<8x64xf32>
    %201 = vector.extract_strided_slice %198 {offsets = [0, 128], sizes = [8, 64], strides = [1, 1]} : vector<8x192xf32> to vector<8x64xf32>
    %202 = vector.extract_strided_slice %192 {offsets = [0, 192], sizes = [8, 64], strides = [1, 1]} : vector<8x256xf32> to vector<8x64xf32>
    %203 = math.tanh %202 : vector<8x64xf32>
    %204 = arith.mulf %200, %180 : vector<8x64xf32>
    %205 = arith.mulf %199, %203 : vector<8x64xf32>
    %206 = arith.addf %204, %205 : vector<8x64xf32>
    %207 = math.tanh %206 : vector<8x64xf32>
    %208 = arith.mulf %201, %207 : vector<8x64xf32>
    %209 = vector.extract_strided_slice %208 {offsets = [0, 0], sizes = [8, 32], strides = [1, 1]} : vector<8x64xf32> to vector<8x32xf32>
    %c56_58 = arith.constant 56 : index
    %c0_59 = arith.constant 0 : index
    %210 = vector.load %arg3[%c56_58, %c0_59] : memref<64x64xf32, #tpu.memory_space<vmem>>, vector<8x32xf32>
    tpu.vector_store %arg3[%c56_58, %c0_59], %209 {strides = array<i32>} : memref<64x64xf32, #tpu.memory_space<vmem>>, vector<8x32xf32>,
    %211 = vector.extract_strided_slice %208 {offsets = [0, 32], sizes = [8, 32], strides = [1, 1]} : vector<8x64xf32> to vector<8x32xf32>
    %c0_60 = arith.constant 0 : index
    %c32_61 = arith.constant 32 : index
    %212 = vector.load %arg3[%c0_60, %c32_61] : memref<64x64xf32, #tpu.memory_space<vmem>>, vector<8x32xf32>
    tpu.vector_store %arg3[%c0_60, %c32_61], %211 {strides = array<i32>} : memref<64x64xf32, #tpu.memory_space<vmem>>, vector<8x32xf32>,
    return
  }
}

</mosaic_0001>

<llo_original>
// kernel: bi_rnn_fout_fused.1
$region0: #{bi_rnn_fout_fused.1}
  #allocation0 [shape = 'u32[]', space=smem, size = 0x4, offset = 0x4, fixed_abs, tag = 'smem constant byte address 0x4 - core index']
  #allocation1 [shape = 'u32[144,128]{1,0:T(1,128)}', space=vmem, size = 0x12000, scoped, tag = 'internal scratch']
  %s0 = inlined_call_operand.vmem [shape: f32[64,16], index: 0, kind: input, shape index: {}]
  %s1 = inlined_call_operand.vmem [shape: f32[16,512], index: 1, kind: input, shape index: {}]
  %s2 = inlined_call_operand.vmem [shape: f32[64,256], index: 2, kind: input, shape index: {}]
  %s3 = inlined_call_operand.vmem [shape: f32[64,64], index: 3, kind: output, shape index: {}]
  %s4 = sld [smem:[#allocation0]]
  $region22: #{bi_rnn_fout_fused.1} parent=0
    _
  %s6 = ssub.s32 1, %s4
  %s7 = scalar_select 0, %s6, %s4
  // Predicated region
  $region2: #{bi_rnn_fout_fused.1} parent=0 // pred_check
    _
  $region3: #{bi_rnn_fout_fused.1} parent=0 // pred_check_branch
    %9 = sbr.rel (0) target = $region5
  $region4: #{bi_rnn_fout_fused.1} parent=0 // pred_region
    _
  $region5: #{bi_rnn_fout_fused.1} parent=0 // pred_fallthru
    _
  // Predicated region
  $region6: #{bi_rnn_fout_fused.1} parent=0 // pred_check
    _
  $region7: #{bi_rnn_fout_fused.1} parent=0 // pred_check_branch
    %11 = sbr.rel (0) target = $region9
  $region8: #{bi_rnn_fout_fused.1} parent=0 // pred_region
    _
  $region9: #{bi_rnn_fout_fused.1} parent=0 // pred_fallthru
    _
  // Predicated region
  $region10: #{bi_rnn_fout_fused.1} parent=0 // pred_check
    _
  $region11: #{bi_rnn_fout_fused.1} parent=0 // pred_check_branch
    %13 = sbr.rel (0) target = $region13
  $region12: #{bi_rnn_fout_fused.1} parent=0 // pred_region
    _
  $region13: #{bi_rnn_fout_fused.1} parent=0 // pred_fallthru
    _
  %v14 = vld [vmem:[%s0] sm:$0xff]
  %v15 = vld [vmem:[%s0 + $0x8] sm:$0xff]
  %v16 = vld [vmem:[%s0 + $0x10] sm:$0xff]
  %v17 = vld [vmem:[%s0 + $0x18] sm:$0xff]
  %v18 = vld [vmem:[%s0 + $0x20] sm:$0xff]
  %v19 = vld [vmem:[%s0 + $0x28] sm:$0xff]
  %v20 = vld [vmem:[%s0 + $0x30] sm:$0xff]
  %v21 = vld [vmem:[%s0 + $0x38] sm:$0xff]
  %v22 = vld [vmem:[%s1] sm:$0xff]
  %v23 = vld [vmem:[%s1 + $0x8] sm:$0xff]
  %v24 = vld [vmem:[%s1 + $0x10] sm:$0xff]
  %v25 = vld [vmem:[%s1 + $0x18] sm:$0xff]
  %v26 = vld [vmem:[%s1 + $0x20] sm:$0xff]
  %v27 = vld [vmem:[%s1 + $0x28] sm:$0xff]
  %v28 = vld [vmem:[%s1 + $0x30] sm:$0xff]
  %v29 = vld [vmem:[%s1 + $0x38] sm:$0xff]
  %vm30 = vcmask 130048
  %v32 = vsel %vm30, %v14, 0
  %v35 = vsel %vm30, %v15, 0
  %v38 = vsel %vm30, %v16, 0
  %v41 = vsel %vm30, %v17, 0
  %v44 = vsel %vm30, %v18, 0
  %v47 = vsel %vm30, %v19, 0
  %v50 = vsel %vm30, %v20, 0
  %v53 = vsel %vm30, %v21, 0
  %55 = vmatprep.subr.mxu0 %v23
  %56 = vmatpush1.msra.mxu0 %v22
  %57 = vmatprep.subr.mxu0 %v27
  %58 = vmatpush1.msra.mxu0 %v26
  %59 = vmatprep.subr.mxu0 0.0
  %60 = vmatpush1.msra.mxu0 0.0
  %61 = vmatprep.subr.mxu0 0.0
  %62 = vmatpush1.msra.mxu0 0.0
  %63 = vmatprep.subr.mxu0 0.0
  %64 = vmatpush1.msra.mxu0 0.0
  %65 = vmatprep.subr.mxu0 0.0
  %66 = vmatpush1.msra.mxu0 0.0
  %67 = vmatprep.subr.mxu0 0.0
  %68 = vmatpush1.msra.mxu0 0.0
  %69 = vmatprep.subr.mxu0 0.0
  %70 = vmatpush1.msra.mxu0 0.0
  %71 = vmatprep.subr.mxu0 0.0
  %72 = vmatpush1.msra.mxu0 0.0
  %73 = vmatprep.subr.mxu0 0.0
  %74 = vmatpush1.msra.mxu0 0.0
  %75 = vmatprep.subr.mxu0 0.0
  %76 = vmatpush1.msra.mxu0 0.0
  %77 = vmatprep.subr.mxu0 0.0
  %78 = vmatpush1.msra.mxu0 0.0
  %79 = vmatprep.subr.mxu0 0.0
  %80 = vmatpush1.msra.mxu0 0.0
  %81 = vmatprep.subr.mxu0 0.0
  %82 = vmatpush1.msra.mxu0 0.0
  %83 = vmatprep.subr.mxu0 0.0
  %84 = vmatpush1.msra.mxu0 0.0
  %85 = vmatprep.subr.mxu0 0.0
  %86 = vmatpush1.msra.mxu0 0.0
  %87 = vmatprep.subr.mxu0 0.0
  %88 = vmatpush1.msra.mxu0 0.0
  %89 = vmatprep.subr.mxu0 0.0
  %90 = vmatpush1.msra.mxu0 0.0
  %91 = vmatprep.subr.mxu0 0.0
  %92 = vmatpush1.msra.mxu0 0.0
  %93 = vmatprep.subr.mxu0 0.0
  %94 = vmatpush1.msra.mxu0 0.0
  %95 = vmatprep.subr.mxu0 0.0
  %96 = vmatpush1.msra.mxu0 0.0
  %97 = vmatprep.subr.mxu0 0.0
  %98 = vmatpush1.msra.mxu0 0.0
  %99 = vmatprep.subr.mxu0 0.0
  %100 = vmatpush1.msra.mxu0 0.0
  %101 = vmatprep.subr.mxu0 0.0
  %102 = vmatpush1.msra.mxu0 0.0
  %103 = vmatprep.subr.mxu0 0.0
  %104 = vmatpush1.msra.mxu0 0.0
  %105 = vmatprep.subr.mxu0 0.0
  %106 = vmatpush1.msra.mxu0 0.0
  %107 = vmatprep.subr.mxu0 0.0
  %108 = vmatpush1.msra.mxu0 0.0
  %109 = vmatprep.subr.mxu0 0.0
  %110 = vmatpush1.msra.mxu0 0.0
  %111 = vmatprep.subr.mxu0 0.0
  %112 = vmatpush1.msra.mxu0 0.0
  %113 = vmatprep.subr.mxu0 0.0
  %114 = vmatpush1.msra.mxu0 0.0
  %115 = vmatprep.subr.mxu0 0.0
  %116 = vmatpush1.msra.mxu0 0.0
  %117 = vmatprep.subr.mxu0 0.0
  %118 = vmatpush1.msra.mxu0 0.0
  %119 = vmatprep.mubr.f32.mxu0 0.0
  %120 = vmatmul.mubr.f32.gmra.mrb[0].mxu0 %v32
  %v121 = vpop.f32.mrb[0].mxu0
  %v122 = vadd.f32 0.0, %v121
  %v123 = vpop.f32.mrb[0].mxu0
  %v124 = vadd.f32 0.0, %v123
  %125 = vmatprep.mubr.f32.mxu0 0.0
  %126 = vmatmul.mubr.f32.gmra.mrb[0].mxu0 %v35
  %v127 = vpop.f32.mrb[0].mxu0
  %v128 = vadd.f32 0.0, %v127
  %v129 = vpop.f32.mrb[0].mxu0
  %v130 = vadd.f32 0.0, %v129
  %131 = vmatprep.mubr.f32.mxu0 0.0
  %132 = vmatmul.mubr.f32.gmra.mrb[0].mxu0 %v38
  %v133 = vpop.f32.mrb[0].mxu0
  %v134 = vadd.f32 0.0, %v133
  %v135 = vpop.f32.mrb[0].mxu0
  %v136 = vadd.f32 0.0, %v135
  %137 = vmatprep.mubr.f32.mxu0 0.0
  %138 = vmatmul.mubr.f32.gmra.mrb[0].mxu0 %v41
  %v139 = vpop.f32.mrb[0].mxu0
  %v140 = vadd.f32 0.0, %v139
  %v141 = vpop.f32.mrb[0].mxu0
  %v142 = vadd.f32 0.0, %v141
  %143 = vmatprep.mubr.f32.mxu0 0.0
  %144 = vmatmul.mubr.f32.gmra.mrb[0].mxu0 %v44
  %v145 = vpop.f32.mrb[0].mxu0
  %v146 = vadd.f32 0.0, %v145
  %v147 = vpop.f32.mrb[0].mxu0
  %v148 = vadd.f32 0.0, %v147
  %149 = vmatprep.mubr.f32.mxu0 0.0
  %150 = vmatmul.mubr.f32.gmra.mrb[0].mxu0 %v47
  %v151 = vpop.f32.mrb[0].mxu0
  %v152 = vadd.f32 0.0, %v151
  %v153 = vpop.f32.mrb[0].mxu0
  %v154 = vadd.f32 0.0, %v153
  %155 = vmatprep.mubr.f32.mxu0 0.0
  %156 = vmatmul.mubr.f32.gmra.mrb[0].mxu0 %v50
  %v157 = vpop.f32.mrb[0].mxu0
  %v158 = vadd.f32 0.0, %v157
  %v159 = vpop.f32.mrb[0].mxu0
  %v160 = vadd.f32 0.0, %v159
  %161 = vmatprep.mubr.f32.mxu0 0.0
  %162 = vmatmul.mubr.f32.gmra.mrb[0].mxu0 %v53
  %v163 = vpop.f32.mrb[0].mxu0
  %v164 = vadd.f32 0.0, %v163
  %v165 = vpop.f32.mrb[0].mxu0
  %v166 = vadd.f32 0.0, %v165
  %167 = vdwg.mxu0
  %168 = vmatprep.subr.mxu0 %v25
  %169 = vmatpush1.msra.mxu0 %v24
  %170 = vmatprep.subr.mxu0 %v29
  %171 = vmatpush1.msra.mxu0 %v28
  %172 = vmatprep.subr.mxu0 0.0
  %173 = vmatpush1.msra.mxu0 0.0
  %174 = vmatprep.subr.mxu0 0.0
  %175 = vmatpush1.msra.mxu0 0.0
  %176 = vmatprep.subr.mxu0 0.0
  %177 = vmatpush1.msra.mxu0 0.0
  %178 = vmatprep.subr.mxu0 0.0
  %179 = vmatpush1.msra.mxu0 0.0
  %180 = vmatprep.subr.mxu0 0.0
  %181 = vmatpush1.msra.mxu0 0.0
  %182 = vmatprep.subr.mxu0 0.0
  %183 = vmatpush1.msra.mxu0 0.0
  %184 = vmatprep.subr.mxu0 0.0
  %185 = vmatpush1.msra.mxu0 0.0
  %186 = vmatprep.subr.mxu0 0.0
  %187 = vmatpush1.msra.mxu0 0.0
  %188 = vmatprep.subr.mxu0 0.0
  %189 = vmatpush1.msra.mxu0 0.0
  %190 = vmatprep.subr.mxu0 0.0
  %191 = vmatpush1.msra.mxu0 0.0
  %192 = vmatprep.subr.mxu0 0.0
  %193 = vmatpush1.msra.mxu0 0.0
  %194 = vmatprep.subr.mxu0 0.0
  %195 = vmatpush1.msra.mxu0 0.0
  %196 = vmatprep.subr.mxu0 0.0
  %197 = vmatpush1.msra.mxu0 0.0
  %198 = vmatprep.subr.mxu0 0.0
  %199 = vmatpush1.msra.mxu0 0.0
  %200 = vmatprep.subr.mxu0 0.0
  %201 = vmatpush1.msra.mxu0 0.0
  %202 = vmatprep.subr.mxu0 0.0
  %203 = vmatpush1.msra.mxu0 0.0
  %204 = vmatprep.subr.mxu0 0.0
  %205 = vmatpush1.msra.mxu0 0.0
  %206 = vmatprep.subr.mxu0 0.0
  %207 = vmatpush1.msra.mxu0 0.0
  %208 = vmatprep.subr.mxu0 0.0
  %209 = vmatpush1.msra.mxu0 0.0
  %210 = vmatprep.subr.mxu0 0.0
  %211 = vmatpush1.msra.mxu0 0.0
  %212 = vmatprep.subr.mxu0 0.0
  %213 = vmatpush1.msra.mxu0 0.0
  %214 = vmatprep.subr.mxu0 0.0
  %215 = vmatpush1.msra.mxu0 0.0
  %216 = vmatprep.subr.mxu0 0.0
  %217 = vmatpush1.msra.mxu0 0.0
  %218 = vmatprep.subr.mxu0 0.0
  %219 = vmatpush1.msra.mxu0 0.0
  %220 = vmatprep.subr.mxu0 0.0
  %221 = vmatpush1.msra.mxu0 0.0
  %222 = vmatprep.subr.mxu0 0.0
  %223 = vmatpush1.msra.mxu0 0.0
  %224 = vmatprep.subr.mxu0 0.0
  %225 = vmatpush1.msra.mxu0 0.0
  %226 = vmatprep.subr.mxu0 0.0
  %227 = vmatpush1.msra.mxu0 0.0
  %228 = vmatprep.subr.mxu0 0.0
  %229 = vmatpush1.msra.mxu0 0.0
  %230 = vmatprep.subr.mxu0 0.0
  %231 = vmatpush1.msra.mxu0 0.0
  %232 = vmatprep.mubr.f32.mxu0 0.0
  %233 = vmatmul.mubr.f32.gmra.mrb[0].mxu0 %v32
  %v234 = vpop.f32.mrb[0].mxu0
  %v235 = vadd.f32 0.0, %v234
  %v236 = vpop.f32.mrb[0].mxu0
  %v237 = vadd.f32 0.0, %v236
  %238 = vmatprep.mubr.f32.mxu0 0.0
  %239 = vmatmul.mubr.f32.gmra.mrb[0].mxu0 %v35
  %v240 = vpop.f32.mrb[0].mxu0
  %v241 = vadd.f32 0.0, %v240
  %v242 = vpop.f32.mrb[0].mxu0
  %v243 = vadd.f32 0.0, %v242
  %244 = vmatprep.mubr.f32.mxu0 0.0
  %245 = vmatmul.mubr.f32.gmra.mrb[0].mxu0 %v38
  %v246 = vpop.f32.mrb[0].mxu0
  %v247 = vadd.f32 0.0, %v246
  %v248 = vpop.f32.mrb[0].mxu0
  %v249 = vadd.f32 0.0, %v248
  %250 = vmatprep.mubr.f32.mxu0 0.0
  %251 = vmatmul.mubr.f32.gmra.mrb[0].mxu0 %v41
  %v252 = vpop.f32.mrb[0].mxu0
  %v253 = vadd.f32 0.0, %v252
  %v254 = vpop.f32.mrb[0].mxu0
  %v255 = vadd.f32 0.0, %v254
  %256 = vmatprep.mubr.f32.mxu0 0.0
  %257 = vmatmul.mubr.f32.gmra.mrb[0].mxu0 %v44
  %v258 = vpop.f32.mrb[0].mxu0
  %v259 = vadd.f32 0.0, %v258
  %v260 = vpop.f32.mrb[0].mxu0
  %v261 = vadd.f32 0.0, %v260
  %262 = vmatprep.mubr.f32.mxu0 0.0
  %263 = vmatmul.mubr.f32.gmra.mrb[0].mxu0 %v47
  %v264 = vpop.f32.mrb[0].mxu0
  %v265 = vadd.f32 0.0, %v264
  %v266 = vpop.f32.mrb[0].mxu0
  %v267 = vadd.f32 0.0, %v266
  %268 = vmatprep.mubr.f32.mxu0 0.0
  %269 = vmatmul.mubr.f32.gmra.mrb[0].mxu0 %v50
  %v270 = vpop.f32.mrb[0].mxu0
  %v271 = vadd.f32 0.0, %v270
  %v272 = vpop.f32.mrb[0].mxu0
  %v273 = vadd.f32 0.0, %v272
  %274 = vmatprep.mubr.f32.mxu0 0.0
  %275 = vmatmul.mubr.f32.gmra.mrb[0].mxu0 %v53
  %v276 = vpop.f32.mrb[0].mxu0
  %v277 = vadd.f32 0.0, %v276
  %v278 = vpop.f32.mrb[0].mxu0
  %v279 = vadd.f32 0.0, %v278
  %280 = vdwg.mxu0
  %v281 = vadd.f32 %v122, %v277
  %v282 = vadd.f32 %v124, %v279
  %v283 = vld [vmem:[%s2] sm:$0xff]
  %v284 = vld [vmem:[%s2 + $0x8] sm:$0xff]
  %v285 = vld [vmem:[%s2 + $0x10] sm:$0xff]
  %v286 = vld [vmem:[%s2 + $0x18] sm:$0xff]
  %v287 = vld [vmem:[%s2 + $0x20] sm:$0xff]
  %v288 = vld [vmem:[%s2 + $0x28] sm:$0xff]
  %v289 = vld [vmem:[%s2 + $0x30] sm:$0xff]
  %v290 = vld [vmem:[%s2 + $0x38] sm:$0xff]
  %v291 = vld [vmem:[%s2 + $0x40] sm:$0xff]
  %v292 = vld [vmem:[%s2 + $0x48] sm:$0xff]
  %v293 = vld [vmem:[%s2 + $0x50] sm:$0xff]
  %v294 = vld [vmem:[%s2 + $0x58] sm:$0xff]
  %v295 = vld [vmem:[%s2 + $0x60] sm:$0xff]
  %v296 = vld [vmem:[%s2 + $0x68] sm:$0xff]
  %v297 = vld [vmem:[%s2 + $0x70] sm:$0xff]
  %v298 = vld [vmem:[%s2 + $0x78] sm:$0xff]
  %vm299 = vcmask 523264
  %v301 = vsel %vm299, 0.0, 0
  %303 = vmatprep.subr.mxu0 %v284
  %304 = vmatpush1.msra.mxu0 %v283
  %305 = vmatprep.subr.mxu0 %v286
  %306 = vmatpush1.msra.mxu0 %v285
  %307 = vmatprep.subr.mxu0 %v288
  %308 = vmatpush1.msra.mxu0 %v287
  %309 = vmatprep.subr.mxu0 %v290
  %310 = vmatpush1.msra.mxu0 %v289
  %311 = vmatprep.subr.mxu0 %v292
  %312 = vmatpush1.msra.mxu0 %v291
  %313 = vmatprep.subr.mxu0 %v294
  %314 = vmatpush1.msra.mxu0 %v293
  %315 = vmatprep.subr.mxu0 %v296
  %316 = vmatpush1.msra.mxu0 %v295
  %317 = vmatprep.subr.mxu0 %v298
  %318 = vmatpush1.msra.mxu0 %v297
  %319 = vmatprep.subr.mxu0 0.0
  %320 = vmatpush1.msra.mxu0 0.0
  %321 = vmatprep.subr.mxu0 0.0
  %322 = vmatpush1.msra.mxu0 0.0
  %323 = vmatprep.subr.mxu0 0.0
  %324 = vmatpush1.msra.mxu0 0.0
  %325 = vmatprep.subr.mxu0 0.0
  %326 = vmatpush1.msra.mxu0 0.0
  %327 = vmatprep.subr.mxu0 0.0
  %328 = vmatpush1.msra.mxu0 0.0
  %329 = vmatprep.subr.mxu0 0.0
  %330 = vmatpush1.msra.mxu0 0.0
  %331 = vmatprep.subr.mxu0 0.0
  %332 = vmatpush1.msra.mxu0 0.0
  %333 = vmatprep.subr.mxu0 0.0
  %334 = vmatpush1.msra.mxu0 0.0
  %335 = vmatprep.subr.mxu0 0.0
  %336 = vmatpush1.msra.mxu0 0.0
  %337 = vmatprep.subr.mxu0 0.0
  %338 = vmatpush1.msra.mxu0 0.0
  %339 = vmatprep.subr.mxu0 0.0
  %340 = vmatpush1.msra.mxu0 0.0
  %341 = vmatprep.subr.mxu0 0.0
  %342 = vmatpush1.msra.mxu0 0.0
  %343 = vmatprep.subr.mxu0 0.0
  %344 = vmatpush1.msra.mxu0 0.0
  %345 = vmatprep.subr.mxu0 0.0
  %346 = vmatpush1.msra.mxu0 0.0
  %347 = vmatprep.subr.mxu0 0.0
  %348 = vmatpush1.msra.mxu0 0.0
  %349 = vmatprep.subr.mxu0 0.0
  %350 = vmatpush1.msra.mxu0 0.0
  %351 = vmatprep.subr.mxu0 0.0
  %352 = vmatpush1.msra.mxu0 0.0
  %353 = vmatprep.subr.mxu0 0.0
  %354 = vmatpush1.msra.mxu0 0.0
  %355 = vmatprep.subr.mxu0 0.0
  %356 = vmatpush1.msra.mxu0 0.0
  %357 = vmatprep.subr.mxu0 0.0
  %358 = vmatpush1.msra.mxu0 0.0
  %359 = vmatprep.subr.mxu0 0.0
  %360 = vmatpush1.msra.mxu0 0.0
  %361 = vmatprep.subr.mxu0 0.0
  %362 = vmatpush1.msra.mxu0 0.0
  %363 = vmatprep.subr.mxu0 0.0
  %364 = vmatpush1.msra.mxu0 0.0
  %365 = vmatprep.subr.mxu0 0.0
  %366 = vmatpush1.msra.mxu0 0.0
  %367 = vmatprep.mubr.f32.mxu0 0.0
  %368 = vmatmul.mubr.f32.gmra.mrb[0].mxu0 %v301
  %v369 = vpop.f32.mrb[0].mxu0
  %v370 = vadd.f32 0.0, %v369
  %v371 = vpop.f32.mrb[0].mxu0
  %v372 = vadd.f32 0.0, %v371
  %373 = vdwg.mxu0
  %v374 = vadd.f32 %v281, %v370
  %v375 = vadd.f32 %v282, %v372
  %v376 = vxor.u32 %v374, 2147483648
  %v377 = vxor.u32 %v375, 2147483648
  %v378 = vmul.f32 %v376, 1.442695
  %v379 = vpow.pop %v378
  %v380 = vmul.f32 %v377, 1.442695
  %v381 = vpow.pop %v380
  %v382 = vadd.f32 %v379, 1.0
  %v383 = vadd.f32 %v381, 1.0
  %v384 = vrcp.pop %v382
  %v385 = vmul.f32 1.0, %v384
  %v386 = vrcp.pop %v383
  %v387 = vmul.f32 1.0, %v386
  %v388 = vtanh.pop %v375
  %v389 = vmul.f32 %v385, 0.0
  %391 = vrot.lane.b32.xlu0 %v388, 64
  %v392 = vpop.permute.xlu0 %391
  %v394 = vmul.f32 %v385, %v392
  %396 = vrot.lane.b32.xlu0 %v394, 64
  %v397 = vpop.permute.xlu0 %396
  %v399 = vadd.f32 %v389, %v397
  %v400 = vtanh.pop %v399
  %402 = vrot.lane.b32.xlu0 %v400, 64
  %v403 = vpop.permute.xlu0 %402
  %v405 = vmul.f32 %v387, %v403
  %vm406 = vcmask 261120
  %407 = vst.msk [vmem:[%s3] sm:$0xff] %vm406, %v405
  %vm408 = vcmask 523520
  %409 = vst.msk [vmem:[%s3 + $0x38] sm:$0xff] %vm408, %v405
  %v410 = vadd.f32 %v128, %v271
  %v411 = vadd.f32 %v130, %v273
  %v412 = vld [vmem:[%s2] sm:$0xff]
  %v413 = vld [vmem:[%s2 + $0x8] sm:$0xff]
  %v414 = vld [vmem:[%s2 + $0x10] sm:$0xff]
  %v415 = vld [vmem:[%s2 + $0x18] sm:$0xff]
  %v416 = vld [vmem:[%s2 + $0x20] sm:$0xff]
  %v417 = vld [vmem:[%s2 + $0x28] sm:$0xff]
  %v418 = vld [vmem:[%s2 + $0x30] sm:$0xff]
  %v419 = vld [vmem:[%s2 + $0x38] sm:$0xff]
  %v420 = vld [vmem:[%s2 + $0x40] sm:$0xff]
  %v421 = vld [vmem:[%s2 + $0x48] sm:$0xff]
  %v422 = vld [vmem:[%s2 + $0x50] sm:$0xff]
  %v423 = vld [vmem:[%s2 + $0x58] sm:$0xff]
  %v424 = vld [vmem:[%s2 + $0x60] sm:$0xff]
  %v425 = vld [vmem:[%s2 + $0x68] sm:$0xff]
  %v426 = vld [vmem:[%s2 + $0x70] sm:$0xff]
  %v427 = vld [vmem:[%s2 + $0x78] sm:$0xff]
  %v429 = vsel %vm299, %v405, 0
  %431 = vmatprep.subr.mxu0 %v413
  %432 = vmatpush1.msra.mxu0 %v412
  %433 = vmatprep.subr.mxu0 %v415
  %434 = vmatpush1.msra.mxu0 %v414
  %435 = vmatprep.subr.mxu0 %v417
  %436 = vmatpush1.msra.mxu0 %v416
  %437 = vmatprep.subr.mxu0 %v419
  %438 = vmatpush1.msra.mxu0 %v418
  %439 = vmatprep.subr.mxu0 %v421
  %440 = vmatpush1.msra.mxu0 %v420
  %441 = vmatprep.subr.mxu0 %v423
  %442 = vmatpush1.msra.mxu0 %v422
  %443 = vmatprep.subr.mxu0 %v425
  %444 = vmatpush1.msra.mxu0 %v424
  %445 = vmatprep.subr.mxu0 %v427
  %446 = vmatpush1.msra.mxu0 %v426
  %447 = vmatprep.subr.mxu0 0.0
  %448 = vmatpush1.msra.mxu0 0.0
  %449 = vmatprep.subr.mxu0 0.0
  %450 = vmatpush1.msra.mxu0 0.0
  %451 = vmatprep.subr.mxu0 0.0
  %452 = vmatpush1.msra.mxu0 0.0
  %453 = vmatprep.subr.mxu0 0.0
  %454 = vmatpush1.msra.mxu0 0.0
  %455 = vmatprep.subr.mxu0 0.0
  %456 = vmatpush1.msra.mxu0 0.0
  %457 = vmatprep.subr.mxu0 0.0
  %458 = vmatpush1.msra.mxu0 0.0
  %459 = vmatprep.subr.mxu0 0.0
  %460 = vmatpush1.msra.mxu0 0.0
  %461 = vmatprep.subr.mxu0 0.0
  %462 = vmatpush1.msra.mxu0 0.0
  %463 = vmatprep.subr.mxu0 0.0
  %464 = vmatpush1.msra.mxu0 0.0
  %465 = vmatprep.subr.mxu0 0.0
  %466 = vmatpush1.msra.mxu0 0.0
  %467 = vmatprep.subr.mxu0 0.0
  %468 = vmatpush1.msra.mxu0 0.0
  %469 = vmatprep.subr.mxu0 0.0
  %470 = vmatpush1.msra.mxu0 0.0
  %471 = vmatprep.subr.mxu0 0.0
  %472 = vmatpush1.msra.mxu0 0.0
  %473 = vmatprep.subr.mxu0 0.0
  %474 = vmatpush1.msra.mxu0 0.0
  %475 = vmatprep.subr.mxu0 0.0
  %476 = vmatpush1.msra.mxu0 0.0
  %477 = vmatprep.subr.mxu0 0.0
  %478 = vmatpush1.msra.mxu0 0.0
  %479 = vmatprep.subr.mxu0 0.0
  %480 = vmatpush1.msra.mxu0 0.0
  %481 = vmatprep.subr.mxu0 0.0
  %482 = vmatpush1.msra.mxu0 0.0
  %483 = vmatprep.subr.mxu0 0.0
  %484 = vmatpush1.msra.mxu0 0.0
  %485 = vmatprep.subr.mxu0 0.0
  %486 = vmatpush1.msra.mxu0 0.0
  %487 = vmatprep.subr.mxu0 0.0
  %488 = vmatpush1.msra.mxu0 0.0
  %489 = vmatprep.subr.mxu0 0.0
  %490 = vmatpush1.msra.mxu0 0.0
  %491 = vmatprep.subr.mxu0 0.0
  %492 = vmatpush1.msra.mxu0 0.0
  %493 = vmatprep.subr.mxu0 0.0
  %494 = vmatpush1.msra.mxu0 0.0
  %495 = vmatprep.mubr.f32.mxu0 0.0
  %496 = vmatmul.mubr.f32.gmra.mrb[0].mxu0 %v429
  %v497 = vpop.f32.mrb[0].mxu0
  %v498 = vadd.f32 0.0, %v497
  %v499 = vpop.f32.mrb[0].mxu0
  %v500 = vadd.f32 0.0, %v499
  %501 = vdwg.mxu0
  %v502 = vadd.f32 %v410, %v498
  %v503 = vadd.f32 %v411, %v500
  %v504 = vxor.u32 %v502, 2147483648
  %v505 = vxor.u32 %v503, 2147483648
  %v506 = vmul.f32 %v504, 1.442695
  %v507 = vpow.pop %v506
  %v508 = vmul.f32 %v505, 1.442695
  %v509 = vpow.pop %v508
  %v510 = vadd.f32 %v507, 1.0
  %v511 = vadd.f32 %v509, 1.0
  %v512 = vrcp.pop %v510
  %v513 = vmul.f32 1.0, %v512
  %v514 = vrcp.pop %v511
  %v515 = vmul.f32 1.0, %v514
  %v516 = vtanh.pop %v503
  %v517 = vmul.f32 %v513, %v399
  %519 = vrot.lane.b32.xlu0 %v516, 64
  %v520 = vpop.permute.xlu0 %519
  %v522 = vmul.f32 %v513, %v520
  %524 = vrot.lane.b32.xlu0 %v522, 64
  %v525 = vpop.permute.xlu0 %524
  %v527 = vadd.f32 %v517, %v525
  %v528 = vtanh.pop %v527
  %530 = vrot.lane.b32.xlu0 %v528, 64
  %v531 = vpop.permute.xlu0 %530
  %v533 = vmul.f32 %v515, %v531
  %534 = vst.msk [vmem:[%s3 + $0x8] sm:$0xff] %vm406, %v533
  %535 = vst.msk [vmem:[%s3 + $0x30] sm:$0xff] %vm408, %v533
  %v536 = vadd.f32 %v134, %v265
  %v537 = vadd.f32 %v136, %v267
  %v538 = vld [vmem:[%s2] sm:$0xff]
  %v539 = vld [vmem:[%s2 + $0x8] sm:$0xff]
  %v540 = vld [vmem:[%s2 + $0x10] sm:$0xff]
  %v541 = vld [vmem:[%s2 + $0x18] sm:$0xff]
  %v542 = vld [vmem:[%s2 + $0x20] sm:$0xff]
  %v543 = vld [vmem:[%s2 + $0x28] sm:$0xff]
  %v544 = vld [vmem:[%s2 + $0x30] sm:$0xff]
  %v545 = vld [vmem:[%s2 + $0x38] sm:$0xff]
  %v546 = vld [vmem:[%s2 + $0x40] sm:$0xff]
  %v547 = vld [vmem:[%s2 + $0x48] sm:$0xff]
  %v548 = vld [vmem:[%s2 + $0x50] sm:$0xff]
  %v549 = vld [vmem:[%s2 + $0x58] sm:$0xff]
  %v550 = vld [vmem:[%s2 + $0x60] sm:$0xff]
  %v551 = vld [vmem:[%s2 + $0x68] sm:$0xff]
  %v552 = vld [vmem:[%s2 + $0x70] sm:$0xff]
  %v553 = vld [vmem:[%s2 + $0x78] sm:$0xff]
  %v555 = vsel %vm299, %v533, 0
  %557 = vmatprep.subr.mxu0 %v539
  %558 = vmatpush1.msra.mxu0 %v538
  %559 = vmatprep.subr.mxu0 %v541
  %560 = vmatpush1.msra.mxu0 %v540
  %561 = vmatprep.subr.mxu0 %v543
  %562 = vmatpush1.msra.mxu0 %v542
  %563 = vmatprep.subr.mxu0 %v545
  %564 = vmatpush1.msra.mxu0 %v544
  %565 = vmatprep.subr.mxu0 %v547
  %566 = vmatpush1.msra.mxu0 %v546
  %567 = vmatprep.subr.mxu0 %v549
  %568 = vmatpush1.msra.mxu0 %v548
  %569 = vmatprep.subr.mxu0 %v551
  %570 = vmatpush1.msra.mxu0 %v550
  %571 = vmatprep.subr.mxu0 %v553
  %572 = vmatpush1.msra.mxu0 %v552
  %573 = vmatprep.subr.mxu0 0.0
  %574 = vmatpush1.msra.mxu0 0.0
  %575 = vmatprep.subr.mxu0 0.0
  %576 = vmatpush1.msra.mxu0 0.0
  %577 = vmatprep.subr.mxu0 0.0
  %578 = vmatpush1.msra.mxu0 0.0
  %579 = vmatprep.subr.mxu0 0.0
  %580 = vmatpush1.msra.mxu0 0.0
  %581 = vmatprep.subr.mxu0 0.0
  %582 = vmatpush1.msra.mxu0 0.0
  %583 = vmatprep.subr.mxu0 0.0
  %584 = vmatpush1.msra.mxu0 0.0
  %585 = vmatprep.subr.mxu0 0.0
  %586 = vmatpush1.msra.mxu0 0.0
  %587 = vmatprep.subr.mxu0 0.0
  %588 = vmatpush1.msra.mxu0 0.0
  %589 = vmatprep.subr.mxu0 0.0
  %590 = vmatpush1.msra.mxu0 0.0
  %591 = vmatprep.subr.mxu0 0.0
  %592 = vmatpush1.msra.mxu0 0.0
  %593 = vmatprep.subr.mxu0 0.0
  %594 = vmatpush1.msra.mxu0 0.0
  %595 = vmatprep.subr.mxu0 0.0
  %596 = vmatpush1.msra.mxu0 0.0
  %597 = vmatprep.subr.mxu0 0.0
  %598 = vmatpush1.msra.mxu0 0.0
  %599 = vmatprep.subr.mxu0 0.0
  %600 = vmatpush1.msra.mxu0 0.0
  %601 = vmatprep.subr.mxu0 0.0
  %602 = vmatpush1.msra.mxu0 0.0
  %603 = vmatprep.subr.mxu0 0.0
  %604 = vmatpush1.msra.mxu0 0.0
  %605 = vmatprep.subr.mxu0 0.0
  %606 = vmatpush1.msra.mxu0 0.0
  %607 = vmatprep.subr.mxu0 0.0
  %608 = vmatpush1.msra.mxu0 0.0
  %609 = vmatprep.subr.mxu0 0.0
  %610 = vmatpush1.msra.mxu0 0.0
  %611 = vmatprep.subr.mxu0 0.0
  %612 = vmatpush1.msra.mxu0 0.0
  %613 = vmatprep.subr.mxu0 0.0
  %614 = vmatpush1.msra.mxu0 0.0
  %615 = vmatprep.subr.mxu0 0.0
  %616 = vmatpush1.msra.mxu0 0.0
  %617 = vmatprep.subr.mxu0 0.0
  %618 = vmatpush1.msra.mxu0 0.0
  %619 = vmatprep.subr.mxu0 0.0
  %620 = vmatpush1.msra.mxu0 0.0
  %621 = vmatprep.mubr.f32.mxu0 0.0
  %622 = vmatmul.mubr.f32.gmra.mrb[0].mxu0 %v555
  %v623 = vpop.f32.mrb[0].mxu0
  %v624 = vadd.f32 0.0, %v623
  %v625 = vpop.f32.mrb[0].mxu0
  %v626 = vadd.f32 0.0, %v625
  %627 = vdwg.mxu0
  %v628 = vadd.f32 %v536, %v624
  %v629 = vadd.f32 %v537, %v626
  %v630 = vxor.u32 %v628, 2147483648
  %v631 = vxor.u32 %v629, 2147483648
  %v632 = vmul.f32 %v630, 1.442695
  %v633 = vpow.pop %v632
  %v634 = vmul.f32 %v631, 1.442695
  %v635 = vpow.pop %v634
  %v636 = vadd.f32 %v633, 1.0
  %v637 = vadd.f32 %v635, 1.0
  %v638 = vrcp.pop %v636
  %v639 = vmul.f32 1.0, %v638
  %v640 = vrcp.pop %v637
  %v641 = vmul.f32 1.0, %v640
  %v642 = vtanh.pop %v629
  %v643 = vmul.f32 %v639, %v527
  %645 = vrot.lane.b32.xlu0 %v642, 64
  %v646 = vpop.permute.xlu0 %645
  %v648 = vmul.f32 %v639, %v646
  %650 = vrot.lane.b32.xlu0 %v648, 64
  %v651 = vpop.permute.xlu0 %650
  %v653 = vadd.f32 %v643, %v651
  %v654 = vtanh.pop %v653
  %656 = vrot.lane.b32.xlu0 %v654, 64
  %v657 = vpop.permute.xlu0 %656
  %v659 = vmul.f32 %v641, %v657
  %660 = vst.msk [vmem:[%s3 + $0x10] sm:$0xff] %vm406, %v659
  %661 = vst.msk [vmem:[%s3 + $0x28] sm:$0xff] %vm408, %v659
  %v662 = vadd.f32 %v140, %v259
  %v663 = vadd.f32 %v142, %v261
  %v664 = vld [vmem:[%s2] sm:$0xff]
  %v665 = vld [vmem:[%s2 + $0x8] sm:$0xff]
  %v666 = vld [vmem:[%s2 + $0x10] sm:$0xff]
  %v667 = vld [vmem:[%s2 + $0x18] sm:$0xff]
  %v668 = vld [vmem:[%s2 + $0x20] sm:$0xff]
  %v669 = vld [vmem:[%s2 + $0x28] sm:$0xff]
  %v670 = vld [vmem:[%s2 + $0x30] sm:$0xff]
  %v671 = vld [vmem:[%s2 + $0x38] sm:$0xff]
  %v672 = vld [vmem:[%s2 + $0x40] sm:$0xff]
  %v673 = vld [vmem:[%s2 + $0x48] sm:$0xff]
  %v674 = vld [vmem:[%s2 + $0x50] sm:$0xff]
  %v675 = vld [vmem:[%s2 + $0x58] sm:$0xff]
  %v676 = vld [vmem:[%s2 + $0x60] sm:$0xff]
  %v677 = vld [vmem:[%s2 + $0x68] sm:$0xff]
  %v678 = vld [vmem:[%s2 + $0x70] sm:$0xff]
  %v679 = vld [vmem:[%s2 + $0x78] sm:$0xff]
  %v681 = vsel %vm299, %v659, 0
  %683 = vmatprep.subr.mxu0 %v665
  %684 = vmatpush1.msra.mxu0 %v664
  %685 = vmatprep.subr.mxu0 %v667
  %686 = vmatpush1.msra.mxu0 %v666
  %687 = vmatprep.subr.mxu0 %v669
  %688 = vmatpush1.msra.mxu0 %v668
  %689 = vmatprep.subr.mxu0 %v671
  %690 = vmatpush1.msra.mxu0 %v670
  %691 = vmatprep.subr.mxu0 %v673
  %692 = vmatpush1.msra.mxu0 %v672
  %693 = vmatprep.subr.mxu0 %v675
  %694 = vmatpush1.msra.mxu0 %v674
  %695 = vmatprep.subr.mxu0 %v677
  %696 = vmatpush1.msra.mxu0 %v676
  %697 = vmatprep.subr.mxu0 %v679
  %698 = vmatpush1.msra.mxu0 %v678
  %699 = vmatprep.subr.mxu0 0.0
  %700 = vmatpush1.msra.mxu0 0.0
  %701 = vmatprep.subr.mxu0 0.0
  %702 = vmatpush1.msra.mxu0 0.0
  %703 = vmatprep.subr.mxu0 0.0
  %704 = vmatpush1.msra.mxu0 0.0
  %705 = vmatprep.subr.mxu0 0.0
  %706 = vmatpush1.msra.mxu0 0.0
  %707 = vmatprep.subr.mxu0 0.0
  %708 = vmatpush1.msra.mxu0 0.0
  %709 = vmatprep.subr.mxu0 0.0
  %710 = vmatpush1.msra.mxu0 0.0
  %711 = vmatprep.subr.mxu0 0.0
  %712 = vmatpush1.msra.mxu0 0.0
  %713 = vmatprep.subr.mxu0 0.0
  %714 = vmatpush1.msra.mxu0 0.0
  %715 = vmatprep.subr.mxu0 0.0
  %716 = vmatpush1.msra.mxu0 0.0
  %717 = vmatprep.subr.mxu0 0.0
  %718 = vmatpush1.msra.mxu0 0.0
  %719 = vmatprep.subr.mxu0 0.0
  %720 = vmatpush1.msra.mxu0 0.0
  %721 = vmatprep.subr.mxu0 0.0
  %722 = vmatpush1.msra.mxu0 0.0
  %723 = vmatprep.subr.mxu0 0.0
  %724 = vmatpush1.msra.mxu0 0.0
  %725 = vmatprep.subr.mxu0 0.0
  %726 = vmatpush1.msra.mxu0 0.0
  %727 = vmatprep.subr.mxu0 0.0
  %728 = vmatpush1.msra.mxu0 0.0
  %729 = vmatprep.subr.mxu0 0.0
  %730 = vmatpush1.msra.mxu0 0.0
  %731 = vmatprep.subr.mxu0 0.0
  %732 = vmatpush1.msra.mxu0 0.0
  %733 = vmatprep.subr.mxu0 0.0
  %734 = vmatpush1.msra.mxu0 0.0
  %735 = vmatprep.subr.mxu0 0.0
  %736 = vmatpush1.msra.mxu0 0.0
  %737 = vmatprep.subr.mxu0 0.0
  %738 = vmatpush1.msra.mxu0 0.0
  %739 = vmatprep.subr.mxu0 0.0
  %740 = vmatpush1.msra.mxu0 0.0
  %741 = vmatprep.subr.mxu0 0.0
  %742 = vmatpush1.msra.mxu0 0.0
  %743 = vmatprep.subr.mxu0 0.0
  %744 = vmatpush1.msra.mxu0 0.0
  %745 = vmatprep.subr.mxu0 0.0
  %746 = vmatpush1.msra.mxu0 0.0
  %747 = vmatprep.mubr.f32.mxu0 0.0
  %748 = vmatmul.mubr.f32.gmra.mrb[0].mxu0 %v681
  %v749 = vpop.f32.mrb[0].mxu0
  %v750 = vadd.f32 0.0, %v749
  %v751 = vpop.f32.mrb[0].mxu0
  %v752 = vadd.f32 0.0, %v751
  %753 = vdwg.mxu0
  %v754 = vadd.f32 %v662, %v750
  %v755 = vadd.f32 %v663, %v752
  %v756 = vxor.u32 %v754, 2147483648
  %v757 = vxor.u32 %v755, 2147483648
  %v758 = vmul.f32 %v756, 1.442695
  %v759 = vpow.pop %v758
  %v760 = vmul.f32 %v757, 1.442695
  %v761 = vpow.pop %v760
  %v762 = vadd.f32 %v759, 1.0
  %v763 = vadd.f32 %v761, 1.0
  %v764 = vrcp.pop %v762
  %v765 = vmul.f32 1.0, %v764
  %v766 = vrcp.pop %v763
  %v767 = vmul.f32 1.0, %v766
  %v768 = vtanh.pop %v755
  %v769 = vmul.f32 %v765, %v653
  %771 = vrot.lane.b32.xlu0 %v768, 64
  %v772 = vpop.permute.xlu0 %771
  %v774 = vmul.f32 %v765, %v772
  %776 = vrot.lane.b32.xlu0 %v774, 64
  %v777 = vpop.permute.xlu0 %776
  %v779 = vadd.f32 %v769, %v777
  %v780 = vtanh.pop %v779
  %782 = vrot.lane.b32.xlu0 %v780, 64
  %v783 = vpop.permute.xlu0 %782
  %v785 = vmul.f32 %v767, %v783
  %786 = vst.msk [vmem:[%s3 + $0x18] sm:$0xff] %vm406, %v785
  %787 = vst.msk [vmem:[%s3 + $0x20] sm:$0xff] %vm408, %v785
  %v788 = vadd.f32 %v146, %v253
  %v789 = vadd.f32 %v148, %v255
  %v790 = vld [vmem:[%s2] sm:$0xff]
  %v791 = vld [vmem:[%s2 + $0x8] sm:$0xff]
  %v792 = vld [vmem:[%s2 + $0x10] sm:$0xff]
  %v793 = vld [vmem:[%s2 + $0x18] sm:$0xff]
  %v794 = vld [vmem:[%s2 + $0x20] sm:$0xff]
  %v795 = vld [vmem:[%s2 + $0x28] sm:$0xff]
  %v796 = vld [vmem:[%s2 + $0x30] sm:$0xff]
  %v797 = vld [vmem:[%s2 + $0x38] sm:$0xff]
  %v798 = vld [vmem:[%s2 + $0x40] sm:$0xff]
  %v799 = vld [vmem:[%s2 + $0x48] sm:$0xff]
  %v800 = vld [vmem:[%s2 + $0x50] sm:$0xff]
  %v801 = vld [vmem:[%s2 + $0x58] sm:$0xff]
  %v802 = vld [vmem:[%s2 + $0x60] sm:$0xff]
  %v803 = vld [vmem:[%s2 + $0x68] sm:$0xff]
  %v804 = vld [vmem:[%s2 + $0x70] sm:$0xff]
  %v805 = vld [vmem:[%s2 + $0x78] sm:$0xff]
  %v807 = vsel %vm299, %v785, 0
  %809 = vmatprep.subr.mxu0 %v791
  %810 = vmatpush1.msra.mxu0 %v790
  %811 = vmatprep.subr.mxu0 %v793
  %812 = vmatpush1.msra.mxu0 %v792
  %813 = vmatprep.subr.mxu0 %v795
  %814 = vmatpush1.msra.mxu0 %v794
  %815 = vmatprep.subr.mxu0 %v797
  %816 = vmatpush1.msra.mxu0 %v796
  %817 = vmatprep.subr.mxu0 %v799
  %818 = vmatpush1.msra.mxu0 %v798
  %819 = vmatprep.subr.mxu0 %v801
  %820 = vmatpush1.msra.mxu0 %v800
  %821 = vmatprep.subr.mxu0 %v803
  %822 = vmatpush1.msra.mxu0 %v802
  %823 = vmatprep.subr.mxu0 %v805
  %824 = vmatpush1.msra.mxu0 %v804
  %825 = vmatprep.subr.mxu0 0.0
  %826 = vmatpush1.msra.mxu0 0.0
  %827 = vmatprep.subr.mxu0 0.0
  %828 = vmatpush1.msra.mxu0 0.0
  %829 = vmatprep.subr.mxu0 0.0
  %830 = vmatpush1.msra.mxu0 0.0
  %831 = vmatprep.subr.mxu0 0.0
  %832 = vmatpush1.msra.mxu0 0.0
  %833 = vmatprep.subr.mxu0 0.0
  %834 = vmatpush1.msra.mxu0 0.0
  %835 = vmatprep.subr.mxu0 0.0
  %836 = vmatpush1.msra.mxu0 0.0
  %837 = vmatprep.subr.mxu0 0.0
  %838 = vmatpush1.msra.mxu0 0.0
  %839 = vmatprep.subr.mxu0 0.0
  %840 = vmatpush1.msra.mxu0 0.0
  %841 = vmatprep.subr.mxu0 0.0
  %842 = vmatpush1.msra.mxu0 0.0
  %843 = vmatprep.subr.mxu0 0.0
  %844 = vmatpush1.msra.mxu0 0.0
  %845 = vmatprep.subr.mxu0 0.0
  %846 = vmatpush1.msra.mxu0 0.0
  %847 = vmatprep.subr.mxu0 0.0
  %848 = vmatpush1.msra.mxu0 0.0
  %849 = vmatprep.subr.mxu0 0.0
  %850 = vmatpush1.msra.mxu0 0.0
  %851 = vmatprep.subr.mxu0 0.0
  %852 = vmatpush1.msra.mxu0 0.0
  %853 = vmatprep.subr.mxu0 0.0
  %854 = vmatpush1.msra.mxu0 0.0
  %855 = vmatprep.subr.mxu0 0.0
  %856 = vmatpush1.msra.mxu0 0.0
  %857 = vmatprep.subr.mxu0 0.0
  %858 = vmatpush1.msra.mxu0 0.0
  %859 = vmatprep.subr.mxu0 0.0
  %860 = vmatpush1.msra.mxu0 0.0
  %861 = vmatprep.subr.mxu0 0.0
  %862 = vmatpush1.msra.mxu0 0.0
  %863 = vmatprep.subr.mxu0 0.0
  %864 = vmatpush1.msra.mxu0 0.0
  %865 = vmatprep.subr.mxu0 0.0
  %866 = vmatpush1.msra.mxu0 0.0
  %867 = vmatprep.subr.mxu0 0.0
  %868 = vmatpush1.msra.mxu0 0.0
  %869 = vmatprep.subr.mxu0 0.0
  %870 = vmatpush1.msra.mxu0 0.0
  %871 = vmatprep.subr.mxu0 0.0
  %872 = vmatpush1.msra.mxu0 0.0
  %873 = vmatprep.mubr.f32.mxu0 0.0
  %874 = vmatmul.mubr.f32.gmra.mrb[0].mxu0 %v807
  %v875 = vpop.f32.mrb[0].mxu0
  %v876 = vadd.f32 0.0, %v875
  %v877 = vpop.f32.mrb[0].mxu0
  %v878 = vadd.f32 0.0, %v877
  %879 = vdwg.mxu0
  %v880 = vadd.f32 %v788, %v876
  %v881 = vadd.f32 %v789, %v878
  %v882 = vxor.u32 %v880, 2147483648
  %v883 = vxor.u32 %v881, 2147483648
  %v884 = vmul.f32 %v882, 1.442695
  %v885 = vpow.pop %v884
  %v886 = vmul.f32 %v883, 1.442695
  %v887 = vpow.pop %v886
  %v888 = vadd.f32 %v885, 1.0
  %v889 = vadd.f32 %v887, 1.0
  %v890 = vrcp.pop %v888
  %v891 = vmul.f32 1.0, %v890
  %v892 = vrcp.pop %v889
  %v893 = vmul.f32 1.0, %v892
  %v894 = vtanh.pop %v881
  %v895 = vmul.f32 %v891, %v779
  %897 = vrot.lane.b32.xlu0 %v894, 64
  %v898 = vpop.permute.xlu0 %897
  %v900 = vmul.f32 %v891, %v898
  %902 = vrot.lane.b32.xlu0 %v900, 64
  %v903 = vpop.permute.xlu0 %902
  %v905 = vadd.f32 %v895, %v903
  %v906 = vtanh.pop %v905
  %908 = vrot.lane.b32.xlu0 %v906, 64
  %v909 = vpop.permute.xlu0 %908
  %v911 = vmul.f32 %v893, %v909
  %912 = vst.msk [vmem:[%s3 + $0x20] sm:$0xff] %vm406, %v911
  %913 = vst.msk [vmem:[%s3 + $0x18] sm:$0xff] %vm408, %v911
  %v914 = vadd.f32 %v152, %v247
  %v915 = vadd.f32 %v154, %v249
  %v916 = vld [vmem:[%s2] sm:$0xff]
  %v917 = vld [vmem:[%s2 + $0x8] sm:$0xff]
  %v918 = vld [vmem:[%s2 + $0x10] sm:$0xff]
  %v919 = vld [vmem:[%s2 + $0x18] sm:$0xff]
  %v920 = vld [vmem:[%s2 + $0x20] sm:$0xff]
  %v921 = vld [vmem:[%s2 + $0x28] sm:$0xff]
  %v922 = vld [vmem:[%s2 + $0x30] sm:$0xff]
  %v923 = vld [vmem:[%s2 + $0x38] sm:$0xff]
  %v924 = vld [vmem:[%s2 + $0x40] sm:$0xff]
  %v925 = vld [vmem:[%s2 + $0x48] sm:$0xff]
  %v926 = vld [vmem:[%s2 + $0x50] sm:$0xff]
  %v927 = vld [vmem:[%s2 + $0x58] sm:$0xff]
  %v928 = vld [vmem:[%s2 + $0x60] sm:$0xff]
  %v929 = vld [vmem:[%s2 + $0x68] sm:$0xff]
  %v930 = vld [vmem:[%s2 + $0x70] sm:$0xff]
  %v931 = vld [vmem:[%s2 + $0x78] sm:$0xff]
  %v933 = vsel %vm299, %v911, 0
  %935 = vmatprep.subr.mxu0 %v917
  %936 = vmatpush1.msra.mxu0 %v916
  %937 = vmatprep.subr.mxu0 %v919
  %938 = vmatpush1.msra.mxu0 %v918
  %939 = vmatprep.subr.mxu0 %v921
  %940 = vmatpush1.msra.mxu0 %v920
  %941 = vmatprep.subr.mxu0 %v923
  %942 = vmatpush1.msra.mxu0 %v922
  %943 = vmatprep.subr.mxu0 %v925
  %944 = vmatpush1.msra.mxu0 %v924
  %945 = vmatprep.subr.mxu0 %v927
  %946 = vmatpush1.msra.mxu0 %v926
  %947 = vmatprep.subr.mxu0 %v929
  %948 = vmatpush1.msra.mxu0 %v928
  %949 = vmatprep.subr.mxu0 %v931
  %950 = vmatpush1.msra.mxu0 %v930
  %951 = vmatprep.subr.mxu0 0.0
  %952 = vmatpush1.msra.mxu0 0.0
  %953 = vmatprep.subr.mxu0 0.0
  %954 = vmatpush1.msra.mxu0 0.0
  %955 = vmatprep.subr.mxu0 0.0
  %956 = vmatpush1.msra.mxu0 0.0
  %957 = vmatprep.subr.mxu0 0.0
  %958 = vmatpush1.msra.mxu0 0.0
  %959 = vmatprep.subr.mxu0 0.0
  %960 = vmatpush1.msra.mxu0 0.0
  %961 = vmatprep.subr.mxu0 0.0
  %962 = vmatpush1.msra.mxu0 0.0
  %963 = vmatprep.subr.mxu0 0.0
  %964 = vmatpush1.msra.mxu0 0.0
  %965 = vmatprep.subr.mxu0 0.0
  %966 = vmatpush1.msra.mxu0 0.0
  %967 = vmatprep.subr.mxu0 0.0
  %968 = vmatpush1.msra.mxu0 0.0
  %969 = vmatprep.subr.mxu0 0.0
  %970 = vmatpush1.msra.mxu0 0.0
  %971 = vmatprep.subr.mxu0 0.0
  %972 = vmatpush1.msra.mxu0 0.0
  %973 = vmatprep.subr.mxu0 0.0
  %974 = vmatpush1.msra.mxu0 0.0
  %975 = vmatprep.subr.mxu0 0.0
  %976 = vmatpush1.msra.mxu0 0.0
  %977 = vmatprep.subr.mxu0 0.0
  %978 = vmatpush1.msra.mxu0 0.0
  %979 = vmatprep.subr.mxu0 0.0
  %980 = vmatpush1.msra.mxu0 0.0
  %981 = vmatprep.subr.mxu0 0.0
  %982 = vmatpush1.msra.mxu0 0.0
  %983 = vmatprep.subr.mxu0 0.0
  %984 = vmatpush1.msra.mxu0 0.0
  %985 = vmatprep.subr.mxu0 0.0
  %986 = vmatpush1.msra.mxu0 0.0
  %987 = vmatprep.subr.mxu0 0.0
  %988 = vmatpush1.msra.mxu0 0.0
  %989 = vmatprep.subr.mxu0 0.0
  %990 = vmatpush1.msra.mxu0 0.0
  %991 = vmatprep.subr.mxu0 0.0
  %992 = vmatpush1.msra.mxu0 0.0
  %993 = vmatprep.subr.mxu0 0.0
  %994 = vmatpush1.msra.mxu0 0.0
  %995 = vmatprep.subr.mxu0 0.0
  %996 = vmatpush1.msra.mxu0 0.0
  %997 = vmatprep.subr.mxu0 0.0
  %998 = vmatpush1.msra.mxu0 0.0
  %999 = vmatprep.mubr.f32.mxu0 0.0
  %1000 = vmatmul.mubr.f32.gmra.mrb[0].mxu0 %v933
  %v1001 = vpop.f32.mrb[0].mxu0
  %v1002 = vadd.f32 0.0, %v1001
  %v1003 = vpop.f32.mrb[0].mxu0
  %v1004 = vadd.f32 0.0, %v1003
  %1005 = vdwg.mxu0
  %v1006 = vadd.f32 %v914, %v1002
  %v1007 = vadd.f32 %v915, %v1004
  %v1008 = vxor.u32 %v1006, 2147483648
  %v1009 = vxor.u32 %v1007, 2147483648
  %v1010 = vmul.f32 %v1008, 1.442695
  %v1011 = vpow.pop %v1010
  %v1012 = vmul.f32 %v1009, 1.442695
  %v1013 = vpow.pop %v1012
  %v1014 = vadd.f32 %v1011, 1.0
  %v1015 = vadd.f32 %v1013, 1.0
  %v1016 = vrcp.pop %v1014
  %v1017 = vmul.f32 1.0, %v1016
  %v1018 = vrcp.pop %v1015
  %v1019 = vmul.f32 1.0, %v1018
  %v1020 = vtanh.pop %v1007
  %v1021 = vmul.f32 %v1017, %v905
  %1023 = vrot.lane.b32.xlu0 %v1020, 64
  %v1024 = vpop.permute.xlu0 %1023
  %v1026 = vmul.f32 %v1017, %v1024
  %1028 = vrot.lane.b32.xlu0 %v1026, 64
  %v1029 = vpop.permute.xlu0 %1028
  %v1031 = vadd.f32 %v1021, %v1029
  %v1032 = vtanh.pop %v1031
  %1034 = vrot.lane.b32.xlu0 %v1032, 64
  %v1035 = vpop.permute.xlu0 %1034
  %v1037 = vmul.f32 %v1019, %v1035
  %1038 = vst.msk [vmem:[%s3 + $0x28] sm:$0xff] %vm406, %v1037
  %1039 = vst.msk [vmem:[%s3 + $0x10] sm:$0xff] %vm408, %v1037
  %v1040 = vadd.f32 %v158, %v241
  %v1041 = vadd.f32 %v160, %v243
  %v1042 = vld [vmem:[%s2] sm:$0xff]
  %v1043 = vld [vmem:[%s2 + $0x8] sm:$0xff]
  %v1044 = vld [vmem:[%s2 + $0x10] sm:$0xff]
  %v1045 = vld [vmem:[%s2 + $0x18] sm:$0xff]
  %v1046 = vld [vmem:[%s2 + $0x20] sm:$0xff]
  %v1047 = vld [vmem:[%s2 + $0x28] sm:$0xff]
  %v1048 = vld [vmem:[%s2 + $0x30] sm:$0xff]
  %v1049 = vld [vmem:[%s2 + $0x38] sm:$0xff]
  %v1050 = vld [vmem:[%s2 + $0x40] sm:$0xff]
  %v1051 = vld [vmem:[%s2 + $0x48] sm:$0xff]
  %v1052 = vld [vmem:[%s2 + $0x50] sm:$0xff]
  %v1053 = vld [vmem:[%s2 + $0x58] sm:$0xff]
  %v1054 = vld [vmem:[%s2 + $0x60] sm:$0xff]
  %v1055 = vld [vmem:[%s2 + $0x68] sm:$0xff]
  %v1056 = vld [vmem:[%s2 + $0x70] sm:$0xff]
  %v1057 = vld [vmem:[%s2 + $0x78] sm:$0xff]
  %v1059 = vsel %vm299, %v1037, 0
  %1061 = vmatprep.subr.mxu0 %v1043
  %1062 = vmatpush1.msra.mxu0 %v1042
  %1063 = vmatprep.subr.mxu0 %v1045
  %1064 = vmatpush1.msra.mxu0 %v1044
  %1065 = vmatprep.subr.mxu0 %v1047
  %1066 = vmatpush1.msra.mxu0 %v1046
  %1067 = vmatprep.subr.mxu0 %v1049
  %1068 = vmatpush1.msra.mxu0 %v1048
  %1069 = vmatprep.subr.mxu0 %v1051
  %1070 = vmatpush1.msra.mxu0 %v1050
  %1071 = vmatprep.subr.mxu0 %v1053
  %1072 = vmatpush1.msra.mxu0 %v1052
  %1073 = vmatprep.subr.mxu0 %v1055
  %1074 = vmatpush1.msra.mxu0 %v1054
  %1075 = vmatprep.subr.mxu0 %v1057
  %1076 = vmatpush1.msra.mxu0 %v1056
  %1077 = vmatprep.subr.mxu0 0.0
  %1078 = vmatpush1.msra.mxu0 0.0
  %1079 = vmatprep.subr.mxu0 0.0
  %1080 = vmatpush1.msra.mxu0 0.0
  %1081 = vmatprep.subr.mxu0 0.0
  %1082 = vmatpush1.msra.mxu0 0.0
  %1083 = vmatprep.subr.mxu0 0.0
  %1084 = vmatpush1.msra.mxu0 0.0
  %1085 = vmatprep.subr.mxu0 0.0
  %1086 = vmatpush1.msra.mxu0 0.0
  %1087 = vmatprep.subr.mxu0 0.0
  %1088 = vmatpush1.msra.mxu0 0.0
  %1089 = vmatprep.subr.mxu0 0.0
  %1090 = vmatpush1.msra.mxu0 0.0
  %1091 = vmatprep.subr.mxu0 0.0
  %1092 = vmatpush1.msra.mxu0 0.0
  %1093 = vmatprep.subr.mxu0 0.0
  %1094 = vmatpush1.msra.mxu0 0.0
  %1095 = vmatprep.subr.mxu0 0.0
  %1096 = vmatpush1.msra.mxu0 0.0
  %1097 = vmatprep.subr.mxu0 0.0
  %1098 = vmatpush1.msra.mxu0 0.0
  %1099 = vmatprep.subr.mxu0 0.0
  %1100 = vmatpush1.msra.mxu0 0.0
  %1101 = vmatprep.subr.mxu0 0.0
  %1102 = vmatpush1.msra.mxu0 0.0
  %1103 = vmatprep.subr.mxu0 0.0
  %1104 = vmatpush1.msra.mxu0 0.0
  %1105 = vmatprep.subr.mxu0 0.0
  %1106 = vmatpush1.msra.mxu0 0.0
  %1107 = vmatprep.subr.mxu0 0.0
  %1108 = vmatpush1.msra.mxu0 0.0
  %1109 = vmatprep.subr.mxu0 0.0
  %1110 = vmatpush1.msra.mxu0 0.0
  %1111 = vmatprep.subr.mxu0 0.0
  %1112 = vmatpush1.msra.mxu0 0.0
  %1113 = vmatprep.subr.mxu0 0.0
  %1114 = vmatpush1.msra.mxu0 0.0
  %1115 = vmatprep.subr.mxu0 0.0
  %1116 = vmatpush1.msra.mxu0 0.0
  %1117 = vmatprep.subr.mxu0 0.0
  %1118 = vmatpush1.msra.mxu0 0.0
  %1119 = vmatprep.subr.mxu0 0.0
  %1120 = vmatpush1.msra.mxu0 0.0
  %1121 = vmatprep.subr.mxu0 0.0
  %1122 = vmatpush1.msra.mxu0 0.0
  %1123 = vmatprep.subr.mxu0 0.0
  %1124 = vmatpush1.msra.mxu0 0.0
  %1125 = vmatprep.mubr.f32.mxu0 0.0
  %1126 = vmatmul.mubr.f32.gmra.mrb[0].mxu0 %v1059
  %v1127 = vpop.f32.mrb[0].mxu0
  %v1128 = vadd.f32 0.0, %v1127
  %v1129 = vpop.f32.mrb[0].mxu0
  %v1130 = vadd.f32 0.0, %v1129
  %1131 = vdwg.mxu0
  %v1132 = vadd.f32 %v1040, %v1128
  %v1133 = vadd.f32 %v1041, %v1130
  %v1134 = vxor.u32 %v1132, 2147483648
  %v1135 = vxor.u32 %v1133, 2147483648
  %v1136 = vmul.f32 %v1134, 1.442695
  %v1137 = vpow.pop %v1136
  %v1138 = vmul.f32 %v1135, 1.442695
  %v1139 = vpow.pop %v1138
  %v1140 = vadd.f32 %v1137, 1.0
  %v1141 = vadd.f32 %v1139, 1.0
  %v1142 = vrcp.pop %v1140
  %v1143 = vmul.f32 1.0, %v1142
  %v1144 = vrcp.pop %v1141
  %v1145 = vmul.f32 1.0, %v1144
  %v1146 = vtanh.pop %v1133
  %v1147 = vmul.f32 %v1143, %v1031
  %1149 = vrot.lane.b32.xlu0 %v1146, 64
  %v1150 = vpop.permute.xlu0 %1149
  %v1152 = vmul.f32 %v1143, %v1150
  %1154 = vrot.lane.b32.xlu0 %v1152, 64
  %v1155 = vpop.permute.xlu0 %1154
  %v1157 = vadd.f32 %v1147, %v1155
  %v1158 = vtanh.pop %v1157
  %1160 = vrot.lane.b32.xlu0 %v1158, 64
  %v1161 = vpop.permute.xlu0 %1160
  %v1163 = vmul.f32 %v1145, %v1161
  %1164 = vst.msk [vmem:[%s3 + $0x30] sm:$0xff] %vm406, %v1163
  %1165 = vst.msk [vmem:[%s3 + $0x8] sm:$0xff] %vm408, %v1163
  %v1166 = vadd.f32 %v164, %v235
  %v1167 = vadd.f32 %v166, %v237
  %v1168 = vld [vmem:[%s2] sm:$0xff]
  %v1169 = vld [vmem:[%s2 + $0x8] sm:$0xff]
  %v1170 = vld [vmem:[%s2 + $0x10] sm:$0xff]
  %v1171 = vld [vmem:[%s2 + $0x18] sm:$0xff]
  %v1172 = vld [vmem:[%s2 + $0x20] sm:$0xff]
  %v1173 = vld [vmem:[%s2 + $0x28] sm:$0xff]
  %v1174 = vld [vmem:[%s2 + $0x30] sm:$0xff]
  %v1175 = vld [vmem:[%s2 + $0x38] sm:$0xff]
  %v1176 = vld [vmem:[%s2 + $0x40] sm:$0xff]
  %v1177 = vld [vmem:[%s2 + $0x48] sm:$0xff]
  %v1178 = vld [vmem:[%s2 + $0x50] sm:$0xff]
  %v1179 = vld [vmem:[%s2 + $0x58] sm:$0xff]
  %v1180 = vld [vmem:[%s2 + $0x60] sm:$0xff]
  %v1181 = vld [vmem:[%s2 + $0x68] sm:$0xff]
  %v1182 = vld [vmem:[%s2 + $0x70] sm:$0xff]
  %v1183 = vld [vmem:[%s2 + $0x78] sm:$0xff]
  %v1185 = vsel %vm299, %v1163, 0
  %1187 = vmatprep.subr.mxu0 %v1169
  %1188 = vmatpush1.msra.mxu0 %v1168
  %1189 = vmatprep.subr.mxu0 %v1171
  %1190 = vmatpush1.msra.mxu0 %v1170
  %1191 = vmatprep.subr.mxu0 %v1173
  %1192 = vmatpush1.msra.mxu0 %v1172
  %1193 = vmatprep.subr.mxu0 %v1175
  %1194 = vmatpush1.msra.mxu0 %v1174
  %1195 = vmatprep.subr.mxu0 %v1177
  %1196 = vmatpush1.msra.mxu0 %v1176
  %1197 = vmatprep.subr.mxu0 %v1179
  %1198 = vmatpush1.msra.mxu0 %v1178
  %1199 = vmatprep.subr.mxu0 %v1181
  %1200 = vmatpush1.msra.mxu0 %v1180
  %1201 = vmatprep.subr.mxu0 %v1183
  %1202 = vmatpush1.msra.mxu0 %v1182
  %1203 = vmatprep.subr.mxu0 0.0
  %1204 = vmatpush1.msra.mxu0 0.0
  %1205 = vmatprep.subr.mxu0 0.0
  %1206 = vmatpush1.msra.mxu0 0.0
  %1207 = vmatprep.subr.mxu0 0.0
  %1208 = vmatpush1.msra.mxu0 0.0
  %1209 = vmatprep.subr.mxu0 0.0
  %1210 = vmatpush1.msra.mxu0 0.0
  %1211 = vmatprep.subr.mxu0 0.0
  %1212 = vmatpush1.msra.mxu0 0.0
  %1213 = vmatprep.subr.mxu0 0.0
  %1214 = vmatpush1.msra.mxu0 0.0
  %1215 = vmatprep.subr.mxu0 0.0
  %1216 = vmatpush1.msra.mxu0 0.0
  %1217 = vmatprep.subr.mxu0 0.0
  %1218 = vmatpush1.msra.mxu0 0.0
  %1219 = vmatprep.subr.mxu0 0.0
  %1220 = vmatpush1.msra.mxu0 0.0
  %1221 = vmatprep.subr.mxu0 0.0
  %1222 = vmatpush1.msra.mxu0 0.0
  %1223 = vmatprep.subr.mxu0 0.0
  %1224 = vmatpush1.msra.mxu0 0.0
  %1225 = vmatprep.subr.mxu0 0.0
  %1226 = vmatpush1.msra.mxu0 0.0
  %1227 = vmatprep.subr.mxu0 0.0
  %1228 = vmatpush1.msra.mxu0 0.0
  %1229 = vmatprep.subr.mxu0 0.0
  %1230 = vmatpush1.msra.mxu0 0.0
  %1231 = vmatprep.subr.mxu0 0.0
  %1232 = vmatpush1.msra.mxu0 0.0
  %1233 = vmatprep.subr.mxu0 0.0
  %1234 = vmatpush1.msra.mxu0 0.0
  %1235 = vmatprep.subr.mxu0 0.0
  %1236 = vmatpush1.msra.mxu0 0.0
  %1237 = vmatprep.subr.mxu0 0.0
  %1238 = vmatpush1.msra.mxu0 0.0
  %1239 = vmatprep.subr.mxu0 0.0
  %1240 = vmatpush1.msra.mxu0 0.0
  %1241 = vmatprep.subr.mxu0 0.0
  %1242 = vmatpush1.msra.mxu0 0.0
  %1243 = vmatprep.subr.mxu0 0.0
  %1244 = vmatpush1.msra.mxu0 0.0
  %1245 = vmatprep.subr.mxu0 0.0
  %1246 = vmatpush1.msra.mxu0 0.0
  %1247 = vmatprep.subr.mxu0 0.0
  %1248 = vmatpush1.msra.mxu0 0.0
  %1249 = vmatprep.subr.mxu0 0.0
  %1250 = vmatpush1.msra.mxu0 0.0
  %1251 = vmatprep.mubr.f32.mxu0 0.0
  %1252 = vmatmul.mubr.f32.gmra.mrb[0].mxu0 %v1185
  %v1253 = vpop.f32.mrb[0].mxu0
  %v1254 = vadd.f32 0.0, %v1253
  %v1255 = vpop.f32.mrb[0].mxu0
  %v1256 = vadd.f32 0.0, %v1255
  %1257 = vdwg.mxu0
  %v1258 = vadd.f32 %v1166, %v1254
  %v1259 = vadd.f32 %v1167, %v1256
  %v1260 = vxor.u32 %v1258, 2147483648
  %v1261 = vxor.u32 %v1259, 2147483648
  %v1262 = vmul.f32 %v1260, 1.442695
  %v1263 = vpow.pop %v1262
  %v1264 = vmul.f32 %v1261, 1.442695
  %v1265 = vpow.pop %v1264
  %v1266 = vadd.f32 %v1263, 1.0
  %v1267 = vadd.f32 %v1265, 1.0
  %v1268 = vrcp.pop %v1266
  %v1269 = vmul.f32 1.0, %v1268
  %v1270 = vrcp.pop %v1267
  %v1271 = vmul.f32 1.0, %v1270
  %v1272 = vtanh.pop %v1259
  %v1273 = vmul.f32 %v1269, %v1157
  %1275 = vrot.lane.b32.xlu0 %v1272, 64
  %v1276 = vpop.permute.xlu0 %1275
  %v1278 = vmul.f32 %v1269, %v1276
  %1280 = vrot.lane.b32.xlu0 %v1278, 64
  %v1281 = vpop.permute.xlu0 %1280
  %v1283 = vadd.f32 %v1273, %v1281
  %v1284 = vtanh.pop %v1283
  %1286 = vrot.lane.b32.xlu0 %v1284, 64
  %v1287 = vpop.permute.xlu0 %1286
  %v1289 = vmul.f32 %v1271, %v1287
  %1290 = vst.msk [vmem:[%s3 + $0x38] sm:$0xff] %vm406, %v1289
  %1291 = vst.msk [vmem:[%s3] sm:$0xff] %vm408, %v1289
  // Predicated region
  $region14: #{bi_rnn_fout_fused.1} parent=0 // pred_check
    _
  $region15: #{bi_rnn_fout_fused.1} parent=0 // pred_check_branch
    %1293 = sbr.rel (0) target = $region17
  $region16: #{bi_rnn_fout_fused.1} parent=0 // pred_region
    _
  $region17: #{bi_rnn_fout_fused.1} parent=0 // pred_fallthru
    _
  // Predicated region
  $region18: #{bi_rnn_fout_fused.1} parent=0 // pred_check
    _
  $region19: #{bi_rnn_fout_fused.1} parent=0 // pred_check_branch
    %1295 = sbr.rel (0) target = $region21
  $region20: #{bi_rnn_fout_fused.1} parent=0 // pred_region
    _
  $region21: #{bi_rnn_fout_fused.1} parent=0 // pred_fallthru
    _

</llo_original>
